<compile_context>
chip_gen: v7x
topology: tpu7x:2x2x1
jax: 0.10.0
libtpu: 0.0.40
codegen_flags: <defaults>
</compile_context>

<pallas_src>
import functools

import jax
import jax.numpy as jnp
import numpy as np
from jax import lax
from jax.experimental import pallas as pl
from jax.experimental.pallas import tpu as pltpu

_EPS = 1e-5        # torch.nn.LayerNorm default eps
_ALIGN = 16        # bf16 sublane-tile height; every packed segment / feature pad uses it


def _pad_to(n):
    return -(-n // _ALIGN) * _ALIGN


# ------------------------------------------------------------------ kernel ---
def _masked_layernorm(y, gamma, beta, true_dim):
    """LayerNorm over the first `true_dim` lanes of a zero-padded slab.

    Padded lanes of `y` are zero on entry; gamma/beta are zero-padded, so padded
    lanes remain exactly zero on exit (keeps downstream aggregations exact)."""
    mask = (lax.broadcasted_iota(jnp.int32, y.shape, 1) < true_dim).astype(y.dtype)
    inv_cnt = 1.0 / float(true_dim)
    mu = jnp.sum(y, axis=-1, keepdims=True) * inv_cnt          # padded lanes are 0
    d = (y - mu) * mask
    var = jnp.sum(d * d, axis=-1, keepdims=True) * inv_cnt
    return d * lax.rsqrt(var + _EPS) * gamma + beta


def gn_fused_kernel(
    # graph data
    x_ref, e_ref, u_ref, snd_ref, rcv_ref,
    # packed parameters (bf16 slabs)
    ew1_ref, ew2_ref, nw1_ref, nw2_ref, gw1_ref, gw2_ref,
    # outputs (padded slabs)
    ne_ref, nx_ref, nu_ref,
    *, dims, activate_final, normalize):
    f32, bf16 = jnp.float32, jnp.bfloat16
    fe_i, fn_i, fg_i, fe_o, fn_o, fg_o, L = dims
    fe_ip, fn_ip, fg_ip = _pad_to(fe_i), _pad_to(fn_i), _pad_to(fg_i)
    fe_op, fn_op, fg_op = _pad_to(fe_o), _pad_to(fn_o), _pad_to(fg_o)

    x = x_ref[...]                       # [N, fn_ip] f32, zero-padded lanes
    e = e_ref[...]                       # [E, fe_ip]
    u = u_ref[...]                       # [1, fg_ip]
    E, N = e.shape[0], x.shape[0]
    x_b, e_b, u_b = x.astype(bf16), e.astype(bf16), u.astype(bf16)

    # ---- in-kernel gather: bf16 one-hot matrices from iota + int32 edge ids ----
    iota_en = lax.broadcasted_iota(jnp.int32, (E, N), 1)
    snd_oh = (iota_en == snd_ref[...]).astype(f32).astype(bf16)     # [E, N], exact
    rcv_oh = (iota_en == rcv_ref[...]).astype(f32).astype(bf16)     # [E, N], exact
    xs = jnp.dot(snd_oh, x_b, preferred_element_type=f32).astype(bf16)  # x[senders]
    xr = jnp.dot(rcv_oh, x_b, preferred_element_type=f32).astype(bf16)  # x[receivers]

    # ---- edge model: e' = MLP([e, x_src, x_dst, u]) (split matmuls, packed w1) ----
    eo_s = fe_ip
    eo_r = eo_s + fn_ip
    eo_u = eo_r + fn_ip
    eo_b = eo_u + fg_ip
    u_row = (jnp.dot(u_b, ew1_ref[eo_u:eo_b, :], preferred_element_type=f32)
             + ew1_ref[eo_b:eo_b + 1, :].astype(f32))                       # [1, L]
    h = (jnp.dot(e_b, ew1_ref[0:fe_ip, :], preferred_element_type=f32)
         + jnp.dot(xs, ew1_ref[eo_s:eo_r, :], preferred_element_type=f32)
         + jnp.dot(xr, ew1_ref[eo_r:eo_u, :], preferred_element_type=f32)
         + u_row)
    h = jnp.maximum(h, 0.0).astype(bf16)
    new_e = (jnp.dot(h, ew2_ref[0:L, :], preferred_element_type=f32)
             + ew2_ref[L:L + 1, :].astype(f32))
    if activate_final:
        new_e = jnp.maximum(new_e, 0.0)
    if normalize:
        new_e = _masked_layernorm(new_e,
                                  ew2_ref[L + 16:L + 17, :].astype(f32),
                                  ew2_ref[L + 32:L + 33, :].astype(f32), fe_o)
    ne_ref[...] = new_e                                           # [E, fe_op]

    # ---- node model: x' = MLP([x, sum_{e: recv=i} e', u]) -----------------------
    # Scatter-sum as a transposed-LHS (TN) contraction: no [N,E] one-hot buffer.
    agg = lax.dot_general(rcv_oh, new_e.astype(bf16),
                          dimension_numbers=(((0,), (0,)), ((), ())),
                          preferred_element_type=f32).astype(bf16)      # [N, fe_op]
    no_e = fn_ip
    no_u = no_e + fe_op
    no_b = no_u + fg_ip
    u_row = (jnp.dot(u_b, nw1_ref[no_u:no_b, :], preferred_element_type=f32)
             + nw1_ref[no_b:no_b + 1, :].astype(f32))
    h = (jnp.dot(x_b, nw1_ref[0:fn_ip, :], preferred_element_type=f32)
         + jnp.dot(agg, nw1_ref[no_e:no_u, :], preferred_element_type=f32)
         + u_row)
    h = jnp.maximum(h, 0.0).astype(bf16)
    new_x = (jnp.dot(h, nw2_ref[0:L, :], preferred_element_type=f32)
             + nw2_ref[L:L + 1, :].astype(f32))
    if activate_final:
        new_x = jnp.maximum(new_x, 0.0)
    if normalize:
        new_x = _masked_layernorm(new_x,
                                  nw2_ref[L + 16:L + 17, :].astype(f32),
                                  nw2_ref[L + 32:L + 33, :].astype(f32), fn_o)
    nx_ref[...] = new_x                                           # [N, fn_op]

    # ---- global model: u' = MLP([u, sum_i x', sum_e e']) (no LayerNorm) ---------
    x_agg = jnp.sum(new_x, axis=0, keepdims=True).astype(bf16)    # [1, fn_op]
    e_agg = jnp.sum(new_e, axis=0, keepdims=True).astype(bf16)    # [1, fe_op]
    go_n = fg_ip
    go_e = go_n + fn_op
    go_b = go_e + fe_op
    h = (jnp.dot(u_b, gw1_ref[0:fg_ip, :], preferred_element_type=f32)
         + jnp.dot(x_agg, gw1_ref[go_n:go_e, :], preferred_element_type=f32)
         + jnp.dot(e_agg, gw1_ref[go_e:go_b, :], preferred_element_type=f32)
         + gw1_ref[go_b:go_b + 1, :].astype(f32))
    h = jnp.maximum(h, 0.0).astype(bf16)
    new_u = (jnp.dot(h, gw2_ref[0:L, :], preferred_element_type=f32)
             + gw2_ref[L:L + 1, :].astype(f32))
    if activate_final:
        new_u = jnp.maximum(new_u, 0.0)
    nu_ref[...] = new_u                                           # [1, fg_op]


# --------------------------------------------------------------- call helper --
def _full_spec(shape):
    nd = len(shape)
    return pl.BlockSpec(shape, lambda i, _nd=nd: (0,) * _nd)


def _pad_rows(w, rows):
    return jnp.pad(w, ((0, rows - w.shape[0]), (0, 0)))


def _pad_cols(w, cols):
    return jnp.pad(w, ((0, 0), (0, cols - w.shape[1])))


def _bias_block(v, cols):
    """[1, c] row -> zero-padded [16, cols] block (keeps slab slices tile-aligned)."""
    return _pad_rows(_pad_cols(v, cols), _ALIGN)


# ------------------------------------------------------------------- params --
def _linear(key, fan_in, fan_out):
    kw, kb = jax.random.split(key)
    lim = 1.0 / np.sqrt(fan_in)
    w = jax.random.uniform(kw, (fan_in, fan_out), jnp.float32, -lim, lim)
    b = jax.random.uniform(kb, (1, fan_out), jnp.float32, -lim, lim)
    return w, b


def init_params(key, cfg):
    fe_i, fe_o = cfg["n_edge_feat_in"], cfg["n_edge_feat_out"]
    fn_i, fn_o = cfg["n_node_feat_in"], cfg["n_node_feat_out"]
    fg_i, fg_o = cfg["n_global_feat_in"], cfg["n_global_feat_out"]
    L = cfg["latent_size"]
    keys = jax.random.split(key, 6)

    # EdgeModel: MLP(concat[e, x_src, x_dst, u]) -> fe_o  (+LayerNorm)
    w1, b1 = _linear(keys[0], fe_i + 2 * fn_i + fg_i, L)
    w2, b2 = _linear(keys[1], L, fe_o)
    edge = dict(
        w1e=w1[:fe_i], w1s=w1[fe_i:fe_i + fn_i],
        w1r=w1[fe_i + fn_i:fe_i + 2 * fn_i], w1u=w1[fe_i + 2 * fn_i:],
        b1=b1, w2=w2, b2=b2,
        gamma=jnp.ones((1, fe_o), jnp.float32),
        beta=jnp.zeros((1, fe_o), jnp.float32))

    # NodeModel: MLP(concat[x, sum_e(e'), u]) -> fn_o  (+LayerNorm)
    w1, b1 = _linear(keys[2], fn_i + fe_o + fg_i, L)
    w2, b2 = _linear(keys[3], L, fn_o)
    node = dict(
        w1x=w1[:fn_i], w1e=w1[fn_i:fn_i + fe_o], w1u=w1[fn_i + fe_o:],
        b1=b1, w2=w2, b2=b2,
        gamma=jnp.ones((1, fn_o), jnp.float32),
        beta=jnp.zeros((1, fn_o), jnp.float32))

    # GlobalModel: MLP(concat[u, sum_n(x'), sum_e(e')]) -> fg_o  (no LayerNorm)
    w1, b1 = _linear(keys[4], fg_i + fn_o + fe_o, L)
    w2, b2 = _linear(keys[5], L, fg_o)
    glob = dict(
        w1u=w1[:fg_i], w1n=w1[fg_i:fg_i + fn_o], w1e=w1[fg_i + fn_o:],
        b1=b1, w2=w2, b2=b2)

    return dict(edge=edge, node=node, glob=glob)


def pack_params(params, cfg):
    """Pack each model's weights into a few bf16 slabs with 16-row-aligned segments.

    Zero row/col padding keeps the padded-lane algebra exact; bf16 is the MXU-native
    dtype on v5e/v6e/v7x and halves the weight DMA bytes."""
    fe_i, fe_o = cfg["n_edge_feat_in"], cfg["n_edge_feat_out"]
    fn_i, fn_o = cfg["n_node_feat_in"], cfg["n_node_feat_out"]
    fg_i, fg_o = cfg["n_global_feat_in"], cfg["n_global_feat_out"]
    L = cfg["latent_size"]
    assert L % _ALIGN == 0, "latent_size must be a multiple of 16 for packed slabs"
    fe_ip, fn_ip, fg_ip = _pad_to(fe_i), _pad_to(fn_i), _pad_to(fg_i)
    fe_op, fn_op, fg_op = _pad_to(fe_o), _pad_to(fn_o), _pad_to(fg_o)
    bf16 = jnp.bfloat16
    pe, pn, pg = params["edge"], params["node"], params["glob"]

    ew1 = jnp.concatenate(
        [_pad_rows(pe["w1e"], fe_ip), _pad_rows(pe["w1s"], fn_ip),
         _pad_rows(pe["w1r"], fn_ip), _pad_rows(pe["w1u"], fg_ip),
         _pad_rows(pe["b1"], _ALIGN)], axis=0).astype(bf16)          # [5*16, L]
    ew2 = jnp.concatenate(
        [_pad_cols(pe["w2"], fe_op), _bias_block(pe["b2"], fe_op),
         _bias_block(pe["gamma"], fe_op), _bias_block(pe["beta"], fe_op)],
        axis=0).astype(bf16)                                         # [L+48, fe_op]

    nw1 = jnp.concatenate(
        [_pad_rows(pn["w1x"], fn_ip), _pad_rows(pn["w1e"], fe_op),
         _pad_rows(pn["w1u"], fg_ip), _pad_rows(pn["b1"], _ALIGN)],
        axis=0).astype(bf16)                                         # [4*16, L]
    nw2 = jnp.concatenate(
        [_pad_cols(pn["w2"], fn_op), _bias_block(pn["b2"], fn_op),
         _bias_block(pn["gamma"], fn_op), _bias_block(pn["beta"], fn_op)],
        axis=0).astype(bf16)                                         # [L+48, fn_op]

    gw1 = jnp.concatenate(
        [_pad_rows(pg["w1u"], fg_ip), _pad_rows(pg["w1n"], fn_op),
         _pad_rows(pg["w1e"], fe_op), _pad_rows(pg["b1"], _ALIGN)],
        axis=0).astype(bf16)                                         # [4*16, L]
    gw2 = jnp.concatenate(
        [_pad_cols(pg["w2"], fg_op), _bias_block(pg["b2"], fg_op)],
        axis=0).astype(bf16)                                         # [L+16, fg_op]

    return dict(ew1=ew1, ew2=ew2, nw1=nw1, nw2=nw2, gw1=gw1, gw2=gw2)


# ------------------------------------------------------------------ forward --
def graph_network_block(params, x, edge_attr, edge_index, u, cfg,
                        activate_final=True, normalize=True):
    E, N = edge_attr.shape[0], x.shape[0]
    L = cfg["latent_size"]
    fe_i, fn_i, fg_i = cfg["n_edge_feat_in"], cfg["n_node_feat_in"], cfg["n_global_feat_in"]
    fe_o, fn_o, fg_o = cfg["n_edge_feat_out"], cfg["n_node_feat_out"], cfg["n_global_feat_out"]
    fe_ip, fn_ip, fg_ip = _pad_to(fe_i), _pad_to(fn_i), _pad_to(fg_i)
    fe_op, fn_op, fg_op = _pad_to(fe_o), _pad_to(fn_o), _pad_to(fg_o)
    f32 = jnp.float32

    pk = pack_params(params, cfg)                      # 6 bf16 weight slabs
    x_p = _pad_cols(x.astype(f32), fn_ip)
    e_p = _pad_cols(edge_attr.astype(f32), fe_ip)
    u_p = _pad_cols(u.astype(f32), fg_ip)
    snd_col = edge_index[0].astype(jnp.int32).reshape(E, 1)
    rcv_col = edge_index[1].astype(jnp.int32).reshape(E, 1)

    inputs = (x_p, e_p, u_p, snd_col, rcv_col,
              pk["ew1"], pk["ew2"], pk["nw1"], pk["nw2"], pk["gw1"], pk["gw2"])
    out_shape = (jax.ShapeDtypeStruct((E, fe_op), f32),   # new_e (padded lanes)
                 jax.ShapeDtypeStruct((N, fn_op), f32),   # new_x (padded lanes)
                 jax.ShapeDtypeStruct((1, fg_op), f32))   # new_u (padded lanes)

    # advisory cost estimate for the XLA scheduler
    flops = 2 * (2 * E * N * fn_ip                     # one-hot gathers
                 + N * E * fe_op                       # scatter-sum (TN contraction)
                 + E * (fe_ip + 2 * fn_ip + fg_ip) * L + E * L * fe_op   # edge MLP
                 + N * (fn_ip + fe_op + fg_ip) * L + N * L * fn_op       # node MLP
                 + (fg_ip + fn_op + fe_op) * L + L * fg_op)              # global MLP
    bytes_accessed = (sum(int(a.size) * a.dtype.itemsize for a in inputs)
                      + 4 * (E * fe_op + N * fn_op + fg_op))
    cost = pl.CostEstimate(flops=int(flops), transcendentals=int(E + N),
                           bytes_accessed=int(bytes_accessed))

    kernel = functools.partial(
        gn_fused_kernel, dims=(fe_i, fn_i, fg_i, fe_o, fn_o, fg_o, L),
        activate_final=activate_final, normalize=normalize)
    ne, nx, nu = pl.pallas_call(
        kernel,
        out_shape=out_shape,
        grid=(1,),
        in_specs=[_full_spec(a.shape) for a in inputs],
        out_specs=tuple(_full_spec(s.shape) for s in out_shape),
        cost_estimate=cost,
    )(*inputs)
    # slice the lane-padded slabs back to true feature widths
    return nx[:, :fn_o], ne[:, :fe_o], nu[:, :fg_o]


# ---------------------------------------------------------- pure-JAX reference
def _mlp_ref(z, w1, b1, w2, b2, gamma, beta, activate_final, normalize):
    h = jnp.maximum(z @ w1 + b1, 0.0)
    y = h @ w2 + b2
    if activate_final:
        y = jnp.maximum(y, 0.0)
    if normalize:
        mu = jnp.mean(y, -1, keepdims=True)
        var = jnp.mean((y - mu) ** 2, -1, keepdims=True)
        y = (y - mu) / jnp.sqrt(var + _EPS) * gamma + beta
    return y


def reference(params, x, edge_attr, edge_index, u, cfg,
              activate_final=True, normalize=True):
    senders, receivers = edge_index[0], edge_index[1]
    E, N = edge_attr.shape[0], x.shape[0]
    pe = params["edge"]
    z = jnp.concatenate([edge_attr, x[senders], x[receivers],
                         jnp.broadcast_to(u, (E, u.shape[1]))], axis=1)
    w1 = jnp.concatenate([pe["w1e"], pe["w1s"], pe["w1r"], pe["w1u"]], axis=0)
    new_e = _mlp_ref(z, w1, pe["b1"], pe["w2"], pe["b2"], pe["gamma"], pe["beta"],
                     activate_final, normalize)

    pn = params["node"]
    agg = jax.ops.segment_sum(new_e, receivers, num_segments=N)
    z = jnp.concatenate([x, agg, jnp.broadcast_to(u, (N, u.shape[1]))], axis=1)
    w1 = jnp.concatenate([pn["w1x"], pn["w1e"], pn["w1u"]], axis=0)
    new_x = _mlp_ref(z, w1, pn["b1"], pn["w2"], pn["b2"], pn["gamma"], pn["beta"],
                     activate_final, normalize)

    pg = params["glob"]
    z = jnp.concatenate([u, jnp.sum(new_x, 0, keepdims=True),
                         jnp.sum(new_e, 0, keepdims=True)], axis=1)
    w1 = jnp.concatenate([pg["w1u"], pg["w1n"], pg["w1e"]], axis=0)
    h = jnp.maximum(z @ w1 + pg["b1"], 0.0)
    y = h @ pg["w2"] + pg["b2"]
    if activate_final:
        y = jnp.maximum(y, 0.0)
    return new_x, new_e, y


# --------------------------------------------------------------------- main --
if __name__ == "__main__":
    cfg = dict(n_edge_feat_in=3, n_edge_feat_out=5,
               n_node_feat_in=4, n_node_feat_out=6,
               n_global_feat_in=2, n_global_feat_out=7,
               latent_size=128)          # module default; keeps hidden dim lane-dense
    N, E = 8, 16

    key = jax.random.PRNGKey(0)
    kp, kx, ke, ks, kr, ku = jax.random.split(key, 6)
    params = init_params(kp, cfg)
    # The kernel runs its matmuls in bf16 (MXU-native) with f32 accumulation; compare
    # against a reference that uses the same bf16-quantized weights so the check
    # isolates kernel error from the deliberate weight-precision choice.
    params = jax.tree_util.tree_map(
        lambda a: a.astype(jnp.bfloat16).astype(jnp.float32), params)

    x = jax.random.normal(kx, (N, cfg["n_node_feat_in"]), jnp.float32)
    edge_attr = jax.random.normal(ke, (E, cfg["n_edge_feat_in"]), jnp.float32)
    senders = jax.random.randint(ks, (E,), 0, N)
    receivers = jax.random.randint(kr, (E,), 0, N)
    edge_index = jnp.stack([senders, receivers])
    u = jax.random.normal(ku, (1, cfg["n_global_feat_in"]), jnp.float32)

    new_x, new_e, new_u = jax.block_until_ready(
        graph_network_block(params, x, edge_attr, edge_index, u, cfg))

    rx, re, ru = reference(params, x, edge_attr, edge_index, u, cfg)
    np.testing.assert_allclose(np.asarray(new_e), np.asarray(re), rtol=5e-2, atol=5e-2)
    np.testing.assert_allclose(np.asarray(new_x), np.asarray(rx), rtol=5e-2, atol=5e-2)
    np.testing.assert_allclose(np.asarray(new_u), np.asarray(ru), rtol=5e-2, atol=5e-2)
    print("KERNEL_OK")
</pallas_src>

<mosaic_0001>
module attributes {stable_mosaic.version = 11 : i64} {
  func.func @gn_fused_kernel(%arg0: i32, %arg1: memref<8x16xf32, #tpu.memory_space<vmem>>, %arg2: memref<16x16xf32, #tpu.memory_space<vmem>>, %arg3: memref<1x16xf32, #tpu.memory_space<vmem>>, %arg4: memref<16x1xi32, #tpu.memory_space<vmem>>, %arg5: memref<16x1xi32, #tpu.memory_space<vmem>>, %arg6: memref<80x128xbf16, #tpu.memory_space<vmem>>, %arg7: memref<176x16xbf16, #tpu.memory_space<vmem>>, %arg8: memref<64x128xbf16, #tpu.memory_space<vmem>>, %arg9: memref<176x16xbf16, #tpu.memory_space<vmem>>, %arg10: memref<64x128xbf16, #tpu.memory_space<vmem>>, %arg11: memref<144x16xbf16, #tpu.memory_space<vmem>>, %arg12: memref<16x16xf32, #tpu.memory_space<vmem>>, %arg13: memref<8x16xf32, #tpu.memory_space<vmem>>, %arg14: memref<1x16xf32, #tpu.memory_space<vmem>>) attributes {dimension_semantics = [#tpu.dimension_semantics<arbitrary>], iteration_bounds = array<i64: 1>, scalar_prefetch = 0 : i64, scratch_operands = 0 : i64, tpu.core_type = #tpu.core_type<tc>, window_params = [{pipeline_mode = #tpu.pipeline_mode<synchronous>, transform_indices = @transform_0, window_bounds = array<i64: 8, 16>}, {pipeline_mode = #tpu.pipeline_mode<synchronous>, transform_indices = @transform_1, window_bounds = array<i64: 16, 16>}, {pipeline_mode = #tpu.pipeline_mode<synchronous>, transform_indices = @transform_2, window_bounds = array<i64: 1, 16>}, {pipeline_mode = #tpu.pipeline_mode<synchronous>, transform_indices = @transform_3, window_bounds = array<i64: 16, 1>}, {pipeline_mode = #tpu.pipeline_mode<synchronous>, transform_indices = @transform_4, window_bounds = array<i64: 16, 1>}, {pipeline_mode = #tpu.pipeline_mode<synchronous>, transform_indices = @transform_5, window_bounds = array<i64: 80, 128>}, {pipeline_mode = #tpu.pipeline_mode<synchronous>, transform_indices = @transform_6, window_bounds = array<i64: 176, 16>}, {pipeline_mode = #tpu.pipeline_mode<synchronous>, transform_indices = @transform_7, window_bounds = array<i64: 64, 128>}, {pipeline_mode = #tpu.pipeline_mode<synchronous>, transform_indices = @transform_8, window_bounds = array<i64: 176, 16>}, {pipeline_mode = #tpu.pipeline_mode<synchronous>, transform_indices = @transform_9, window_bounds = array<i64: 64, 128>}, {pipeline_mode = #tpu.pipeline_mode<synchronous>, transform_indices = @transform_10, window_bounds = array<i64: 144, 16>}, {pipeline_mode = #tpu.pipeline_mode<synchronous>, transform_indices = @transform_11, window_bounds = array<i64: 16, 16>}, {pipeline_mode = #tpu.pipeline_mode<synchronous>, transform_indices = @transform_12, window_bounds = array<i64: 8, 16>}, {pipeline_mode = #tpu.pipeline_mode<synchronous>, transform_indices = @transform_13, window_bounds = array<i64: 1, 16>}]} {
    %c0 = arith.constant 0 : index
    %c0_0 = arith.constant 0 : index
    %0 = vector.load %arg1[%c0, %c0_0] : memref<8x16xf32, #tpu.memory_space<vmem>>, vector<8x16xf32>
    %c0_1 = arith.constant 0 : index
    %c0_2 = arith.constant 0 : index
    %1 = vector.load %arg2[%c0_1, %c0_2] : memref<16x16xf32, #tpu.memory_space<vmem>>, vector<16x16xf32>
    %c0_3 = arith.constant 0 : index
    %c0_4 = arith.constant 0 : index
    %2 = vector.load %arg3[%c0_3, %c0_4] : memref<1x16xf32, #tpu.memory_space<vmem>>, vector<1x16xf32>
    %3 = arith.truncf %0 : vector<8x16xf32> to vector<8x16xbf16>
    %4 = arith.truncf %1 : vector<16x16xf32> to vector<16x16xbf16>
    %5 = arith.truncf %2 : vector<1x16xf32> to vector<1x16xbf16>
    %6 = tpu.iota {dimensions = array<i32: 1>} : vector<16x8xi32>
    %c0_5 = arith.constant 0 : index
    %c0_6 = arith.constant 0 : index
    %7 = vector.load %arg4[%c0_5, %c0_6] : memref<16x1xi32, #tpu.memory_space<vmem>>, vector<16x1xi32>
    %8 = vector.broadcast %7 : vector<16x1xi32> to vector<16x8xi32>
    %9 = arith.cmpi eq, %6, %8 : vector<16x8xi32>
    %10 = arith.extui %9 : vector<16x8xi1> to vector<16x8xi32>
    %11 = arith.sitofp %10 : vector<16x8xi32> to vector<16x8xf32>
    %12 = arith.truncf %11 : vector<16x8xf32> to vector<16x8xbf16>
    %c0_7 = arith.constant 0 : index
    %c0_8 = arith.constant 0 : index
    %13 = vector.load %arg5[%c0_7, %c0_8] : memref<16x1xi32, #tpu.memory_space<vmem>>, vector<16x1xi32>
    %14 = vector.broadcast %13 : vector<16x1xi32> to vector<16x8xi32>
    %15 = arith.cmpi eq, %6, %14 : vector<16x8xi32>
    %16 = arith.extui %15 : vector<16x8xi1> to vector<16x8xi32>
    %17 = arith.sitofp %16 : vector<16x8xi32> to vector<16x8xf32>
    %18 = arith.truncf %17 : vector<16x8xf32> to vector<16x8xbf16>
    %cst = arith.constant dense<0.000000e+00> : vector<16x16xf32>
    %19 = tpu.matmul %12, %3, %cst {dimension_numbers = #tpu.dot_dimension_numbers<[1], [0], [0], [1], [0, 0, 1, 1], [], []>} : vector<16x8xbf16>, vector<8x16xbf16>, vector<16x16xf32> -> vector<16x16xf32>
    %20 = arith.truncf %19 : vector<16x16xf32> to vector<16x16xbf16>
    %cst_9 = arith.constant dense<0.000000e+00> : vector<16x16xf32>
    %21 = tpu.matmul %18, %3, %cst_9 {dimension_numbers = #tpu.dot_dimension_numbers<[1], [0], [0], [1], [0, 0, 1, 1], [], []>} : vector<16x8xbf16>, vector<8x16xbf16>, vector<16x16xf32> -> vector<16x16xf32>
    %22 = arith.truncf %21 : vector<16x16xf32> to vector<16x16xbf16>
    %c48 = arith.constant 48 : index
    %c0_10 = arith.constant 0 : index
    %23 = vector.load %arg6[%c48, %c0_10] : memref<80x128xbf16, #tpu.memory_space<vmem>>, vector<16x128xbf16>
    %cst_11 = arith.constant dense<0.000000e+00> : vector<1x128xf32>
    %24 = tpu.matmul %5, %23, %cst_11 {dimension_numbers = #tpu.dot_dimension_numbers<[1], [0], [0], [1], [0, 0, 1, 1], [], []>} : vector<1x16xbf16>, vector<16x128xbf16>, vector<1x128xf32> -> vector<1x128xf32>
    %c64 = arith.constant 64 : index
    %c0_12 = arith.constant 0 : index
    %25 = vector.load %arg6[%c64, %c0_12] : memref<80x128xbf16, #tpu.memory_space<vmem>>, vector<1x128xbf16>
    %26 = arith.extf %25 : vector<1x128xbf16> to vector<1x128xf32>
    %27 = arith.addf %24, %26 : vector<1x128xf32>
    %c0_13 = arith.constant 0 : index
    %c0_14 = arith.constant 0 : index
    %28 = vector.load %arg6[%c0_13, %c0_14] : memref<80x128xbf16, #tpu.memory_space<vmem>>, vector<16x128xbf16>
    %cst_15 = arith.constant dense<0.000000e+00> : vector<16x128xf32>
    %29 = tpu.matmul %4, %28, %cst_15 {dimension_numbers = #tpu.dot_dimension_numbers<[1], [0], [0], [1], [0, 0, 1, 1], [], []>} : vector<16x16xbf16>, vector<16x128xbf16>, vector<16x128xf32> -> vector<16x128xf32>
    %c16 = arith.constant 16 : index
    %c0_16 = arith.constant 0 : index
    %30 = vector.load %arg6[%c16, %c0_16] : memref<80x128xbf16, #tpu.memory_space<vmem>>, vector<16x128xbf16>
    %cst_17 = arith.constant dense<0.000000e+00> : vector<16x128xf32>
    %31 = tpu.matmul %20, %30, %cst_17 {dimension_numbers = #tpu.dot_dimension_numbers<[1], [0], [0], [1], [0, 0, 1, 1], [], []>} : vector<16x16xbf16>, vector<16x128xbf16>, vector<16x128xf32> -> vector<16x128xf32>
    %32 = arith.addf %29, %31 : vector<16x128xf32>
    %c32 = arith.constant 32 : index
    %c0_18 = arith.constant 0 : index
    %33 = vector.load %arg6[%c32, %c0_18] : memref<80x128xbf16, #tpu.memory_space<vmem>>, vector<16x128xbf16>
    %cst_19 = arith.constant dense<0.000000e+00> : vector<16x128xf32>
    %34 = tpu.matmul %22, %33, %cst_19 {dimension_numbers = #tpu.dot_dimension_numbers<[1], [0], [0], [1], [0, 0, 1, 1], [], []>} : vector<16x16xbf16>, vector<16x128xbf16>, vector<16x128xf32> -> vector<16x128xf32>
    %35 = arith.addf %32, %34 : vector<16x128xf32>
    %36 = vector.broadcast %27 : vector<1x128xf32> to vector<16x128xf32>
    %37 = arith.addf %35, %36 : vector<16x128xf32>
    %cst_20 = arith.constant 0.000000e+00 : f32
    %38 = vector.broadcast %cst_20 : f32 to vector<16x128xf32>
    %39 = arith.maximumf %37, %38 : vector<16x128xf32>
    %40 = arith.truncf %39 : vector<16x128xf32> to vector<16x128xbf16>
    %c0_21 = arith.constant 0 : index
    %c0_22 = arith.constant 0 : index
    %41 = vector.load %arg7[%c0_21, %c0_22] : memref<176x16xbf16, #tpu.memory_space<vmem>>, vector<128x16xbf16>
    %cst_23 = arith.constant dense<0.000000e+00> : vector<16x16xf32>
    %42 = tpu.matmul %40, %41, %cst_23 {dimension_numbers = #tpu.dot_dimension_numbers<[1], [0], [0], [1], [0, 0, 1, 1], [], []>} : vector<16x128xbf16>, vector<128x16xbf16>, vector<16x16xf32> -> vector<16x16xf32>
    %c128 = arith.constant 128 : index
    %c0_24 = arith.constant 0 : index
    %43 = vector.load %arg7[%c128, %c0_24] : memref<176x16xbf16, #tpu.memory_space<vmem>>, vector<1x16xbf16>
    %44 = arith.extf %43 : vector<1x16xbf16> to vector<1x16xf32>
    %45 = vector.broadcast %44 : vector<1x16xf32> to vector<16x16xf32>
    %46 = arith.addf %42, %45 : vector<16x16xf32>
    %cst_25 = arith.constant 0.000000e+00 : f32
    %47 = vector.broadcast %cst_25 : f32 to vector<16x16xf32>
    %48 = arith.maximumf %46, %47 : vector<16x16xf32>
    %c144 = arith.constant 144 : index
    %c0_26 = arith.constant 0 : index
    %49 = vector.load %arg7[%c144, %c0_26] : memref<176x16xbf16, #tpu.memory_space<vmem>>, vector<1x16xbf16>
    %50 = arith.extf %49 : vector<1x16xbf16> to vector<1x16xf32>
    %c160 = arith.constant 160 : index
    %c0_27 = arith.constant 0 : index
    %51 = vector.load %arg7[%c160, %c0_27] : memref<176x16xbf16, #tpu.memory_space<vmem>>, vector<1x16xbf16>
    %52 = arith.extf %51 : vector<1x16xbf16> to vector<1x16xf32>
    %53 = tpu.iota {dimensions = array<i32: 1>} : vector<16x16xi32>
    %c5_i32 = arith.constant 5 : i32
    %54 = vector.broadcast %c5_i32 : i32 to vector<16x16xi32>
    %55 = arith.cmpi slt, %53, %54 : vector<16x16xi32>
    %56 = arith.extui %55 : vector<16x16xi1> to vector<16x16xi32>
    %57 = arith.sitofp %56 : vector<16x16xi32> to vector<16x16xf32>
    %cst_28 = arith.constant dense<0.000000e+00> : vector<16xf32>
    %58 = vector.multi_reduction <add>, %48, %cst_28 [1] : vector<16x16xf32> to vector<16xf32>
    %59 = vector.shape_cast %58 : vector<16xf32> to vector<16x1xf32>
    %cst_29 = arith.constant 2.000000e-01 : f32
    %60 = vector.broadcast %cst_29 : f32 to vector<16x1xf32>
    %61 = arith.mulf %59, %60 : vector<16x1xf32>
    %62 = vector.broadcast %61 : vector<16x1xf32> to vector<16x16xf32>
    %63 = arith.subf %48, %62 : vector<16x16xf32>
    %64 = arith.mulf %63, %57 : vector<16x16xf32>
    %65 = arith.mulf %64, %64 : vector<16x16xf32>
    %cst_30 = arith.constant dense<0.000000e+00> : vector<16xf32>
    %66 = vector.multi_reduction <add>, %65, %cst_30 [1] : vector<16x16xf32> to vector<16xf32>
    %67 = vector.shape_cast %66 : vector<16xf32> to vector<16x1xf32>
    %cst_31 = arith.constant 2.000000e-01 : f32
    %68 = vector.broadcast %cst_31 : f32 to vector<16x1xf32>
    %69 = arith.mulf %67, %68 : vector<16x1xf32>
    %cst_32 = arith.constant 9.99999974E-6 : f32
    %70 = vector.broadcast %cst_32 : f32 to vector<16x1xf32>
    %71 = arith.addf %69, %70 : vector<16x1xf32>
    %72 = math.rsqrt %71 : vector<16x1xf32>
    %73 = vector.broadcast %72 : vector<16x1xf32> to vector<16x16xf32>
    %74 = arith.mulf %64, %73 : vector<16x16xf32>
    %75 = vector.broadcast %50 : vector<1x16xf32> to vector<16x16xf32>
    %76 = arith.mulf %74, %75 : vector<16x16xf32>
    %77 = vector.broadcast %52 : vector<1x16xf32> to vector<16x16xf32>
    %78 = arith.addf %76, %77 : vector<16x16xf32>
    %c0_33 = arith.constant 0 : index
    %c0_34 = arith.constant 0 : index
    %79 = vector.load %arg12[%c0_33, %c0_34] : memref<16x16xf32, #tpu.memory_space<vmem>>, vector<16x16xf32>
    tpu.vector_store %arg12[%c0_33, %c0_34], %78 {strides = array<i32>} : memref<16x16xf32, #tpu.memory_space<vmem>>, vector<16x16xf32>,
    %80 = arith.truncf %78 : vector<16x16xf32> to vector<16x16xbf16>
    %cst_35 = arith.constant dense<0.000000e+00> : vector<8x16xf32>
    %81 = tpu.matmul %18, %80, %cst_35 {dimension_numbers = #tpu.dot_dimension_numbers<[0], [0], [1], [1], [0, 1, 1, 1], [], []>} : vector<16x8xbf16>, vector<16x16xbf16>, vector<8x16xf32> -> vector<8x16xf32>
    %82 = arith.truncf %81 : vector<8x16xf32> to vector<8x16xbf16>
    %c32_36 = arith.constant 32 : index
    %c0_37 = arith.constant 0 : index
    %83 = vector.load %arg8[%c32_36, %c0_37] : memref<64x128xbf16, #tpu.memory_space<vmem>>, vector<16x128xbf16>
    %cst_38 = arith.constant dense<0.000000e+00> : vector<1x128xf32>
    %84 = tpu.matmul %5, %83, %cst_38 {dimension_numbers = #tpu.dot_dimension_numbers<[1], [0], [0], [1], [0, 0, 1, 1], [], []>} : vector<1x16xbf16>, vector<16x128xbf16>, vector<1x128xf32> -> vector<1x128xf32>
    %c48_39 = arith.constant 48 : index
    %c0_40 = arith.constant 0 : index
    %85 = vector.load %arg8[%c48_39, %c0_40] : memref<64x128xbf16, #tpu.memory_space<vmem>>, vector<1x128xbf16>
    %86 = arith.extf %85 : vector<1x128xbf16> to vector<1x128xf32>
    %87 = arith.addf %84, %86 : vector<1x128xf32>
    %c0_41 = arith.constant 0 : index
    %c0_42 = arith.constant 0 : index
    %88 = vector.load %arg8[%c0_41, %c0_42] : memref<64x128xbf16, #tpu.memory_space<vmem>>, vector<16x128xbf16>
    %cst_43 = arith.constant dense<0.000000e+00> : vector<8x128xf32>
    %89 = tpu.matmul %3, %88, %cst_43 {dimension_numbers = #tpu.dot_dimension_numbers<[1], [0], [0], [1], [0, 0, 1, 1], [], []>} : vector<8x16xbf16>, vector<16x128xbf16>, vector<8x128xf32> -> vector<8x128xf32>
    %c16_44 = arith.constant 16 : index
    %c0_45 = arith.constant 0 : index
    %90 = vector.load %arg8[%c16_44, %c0_45] : memref<64x128xbf16, #tpu.memory_space<vmem>>, vector<16x128xbf16>
    %cst_46 = arith.constant dense<0.000000e+00> : vector<8x128xf32>
    %91 = tpu.matmul %82, %90, %cst_46 {dimension_numbers = #tpu.dot_dimension_numbers<[1], [0], [0], [1], [0, 0, 1, 1], [], []>} : vector<8x16xbf16>, vector<16x128xbf16>, vector<8x128xf32> -> vector<8x128xf32>
    %92 = arith.addf %89, %91 : vector<8x128xf32>
    %93 = vector.broadcast %87 : vector<1x128xf32> to vector<8x128xf32>
    %94 = arith.addf %92, %93 : vector<8x128xf32>
    %cst_47 = arith.constant 0.000000e+00 : f32
    %95 = vector.broadcast %cst_47 : f32 to vector<8x128xf32>
    %96 = arith.maximumf %94, %95 : vector<8x128xf32>
    %97 = arith.truncf %96 : vector<8x128xf32> to vector<8x128xbf16>
    %c0_48 = arith.constant 0 : index
    %c0_49 = arith.constant 0 : index
    %98 = vector.load %arg9[%c0_48, %c0_49] : memref<176x16xbf16, #tpu.memory_space<vmem>>, vector<128x16xbf16>
    %cst_50 = arith.constant dense<0.000000e+00> : vector<8x16xf32>
    %99 = tpu.matmul %97, %98, %cst_50 {dimension_numbers = #tpu.dot_dimension_numbers<[1], [0], [0], [1], [0, 0, 1, 1], [], []>} : vector<8x128xbf16>, vector<128x16xbf16>, vector<8x16xf32> -> vector<8x16xf32>
    %c128_51 = arith.constant 128 : index
    %c0_52 = arith.constant 0 : index
    %100 = vector.load %arg9[%c128_51, %c0_52] : memref<176x16xbf16, #tpu.memory_space<vmem>>, vector<1x16xbf16>
    %101 = arith.extf %100 : vector<1x16xbf16> to vector<1x16xf32>
    %102 = vector.broadcast %101 : vector<1x16xf32> to vector<8x16xf32>
    %103 = arith.addf %99, %102 : vector<8x16xf32>
    %cst_53 = arith.constant 0.000000e+00 : f32
    %104 = vector.broadcast %cst_53 : f32 to vector<8x16xf32>
    %105 = arith.maximumf %103, %104 : vector<8x16xf32>
    %c144_54 = arith.constant 144 : index
    %c0_55 = arith.constant 0 : index
    %106 = vector.load %arg9[%c144_54, %c0_55] : memref<176x16xbf16, #tpu.memory_space<vmem>>, vector<1x16xbf16>
    %107 = arith.extf %106 : vector<1x16xbf16> to vector<1x16xf32>
    %c160_56 = arith.constant 160 : index
    %c0_57 = arith.constant 0 : index
    %108 = vector.load %arg9[%c160_56, %c0_57] : memref<176x16xbf16, #tpu.memory_space<vmem>>, vector<1x16xbf16>
    %109 = arith.extf %108 : vector<1x16xbf16> to vector<1x16xf32>
    %110 = tpu.iota {dimensions = array<i32: 1>} : vector<8x16xi32>
    %c6_i32 = arith.constant 6 : i32
    %111 = vector.broadcast %c6_i32 : i32 to vector<8x16xi32>
    %112 = arith.cmpi slt, %110, %111 : vector<8x16xi32>
    %113 = arith.extui %112 : vector<8x16xi1> to vector<8x16xi32>
    %114 = arith.sitofp %113 : vector<8x16xi32> to vector<8x16xf32>
    %cst_58 = arith.constant dense<0.000000e+00> : vector<8xf32>
    %115 = vector.multi_reduction <add>, %105, %cst_58 [1] : vector<8x16xf32> to vector<8xf32>
    %116 = vector.shape_cast %115 : vector<8xf32> to vector<8x1xf32>
    %cst_59 = arith.constant 0.166666672 : f32
    %117 = vector.broadcast %cst_59 : f32 to vector<8x1xf32>
    %118 = arith.mulf %116, %117 : vector<8x1xf32>
    %119 = vector.broadcast %118 : vector<8x1xf32> to vector<8x16xf32>
    %120 = arith.subf %105, %119 : vector<8x16xf32>
    %121 = arith.mulf %120, %114 : vector<8x16xf32>
    %122 = arith.mulf %121, %121 : vector<8x16xf32>
    %cst_60 = arith.constant dense<0.000000e+00> : vector<8xf32>
    %123 = vector.multi_reduction <add>, %122, %cst_60 [1] : vector<8x16xf32> to vector<8xf32>
    %124 = vector.shape_cast %123 : vector<8xf32> to vector<8x1xf32>
    %cst_61 = arith.constant 0.166666672 : f32
    %125 = vector.broadcast %cst_61 : f32 to vector<8x1xf32>
    %126 = arith.mulf %124, %125 : vector<8x1xf32>
    %cst_62 = arith.constant 9.99999974E-6 : f32
    %127 = vector.broadcast %cst_62 : f32 to vector<8x1xf32>
    %128 = arith.addf %126, %127 : vector<8x1xf32>
    %129 = math.rsqrt %128 : vector<8x1xf32>
    %130 = vector.broadcast %129 : vector<8x1xf32> to vector<8x16xf32>
    %131 = arith.mulf %121, %130 : vector<8x16xf32>
    %132 = vector.broadcast %107 : vector<1x16xf32> to vector<8x16xf32>
    %133 = arith.mulf %131, %132 : vector<8x16xf32>
    %134 = vector.broadcast %109 : vector<1x16xf32> to vector<8x16xf32>
    %135 = arith.addf %133, %134 : vector<8x16xf32>
    %c0_63 = arith.constant 0 : index
    %c0_64 = arith.constant 0 : index
    %136 = vector.load %arg13[%c0_63, %c0_64] : memref<8x16xf32, #tpu.memory_space<vmem>>, vector<8x16xf32>
    tpu.vector_store %arg13[%c0_63, %c0_64], %135 {strides = array<i32>} : memref<8x16xf32, #tpu.memory_space<vmem>>, vector<8x16xf32>,
    %cst_65 = arith.constant dense<0.000000e+00> : vector<16xf32>
    %137 = vector.multi_reduction <add>, %135, %cst_65 [0] : vector<8x16xf32> to vector<16xf32>
    %138 = vector.shape_cast %137 : vector<16xf32> to vector<1x16xf32>
    %139 = arith.truncf %138 : vector<1x16xf32> to vector<1x16xbf16>
    %cst_66 = arith.constant dense<0.000000e+00> : vector<16xf32>
    %140 = vector.multi_reduction <add>, %78, %cst_66 [0] : vector<16x16xf32> to vector<16xf32>
    %141 = vector.shape_cast %140 : vector<16xf32> to vector<1x16xf32>
    %142 = arith.truncf %141 : vector<1x16xf32> to vector<1x16xbf16>
    %c0_67 = arith.constant 0 : index
    %c0_68 = arith.constant 0 : index
    %143 = vector.load %arg10[%c0_67, %c0_68] : memref<64x128xbf16, #tpu.memory_space<vmem>>, vector<16x128xbf16>
    %cst_69 = arith.constant dense<0.000000e+00> : vector<1x128xf32>
    %144 = tpu.matmul %5, %143, %cst_69 {dimension_numbers = #tpu.dot_dimension_numbers<[1], [0], [0], [1], [0, 0, 1, 1], [], []>} : vector<1x16xbf16>, vector<16x128xbf16>, vector<1x128xf32> -> vector<1x128xf32>
    %c16_70 = arith.constant 16 : index
    %c0_71 = arith.constant 0 : index
    %145 = vector.load %arg10[%c16_70, %c0_71] : memref<64x128xbf16, #tpu.memory_space<vmem>>, vector<16x128xbf16>
    %cst_72 = arith.constant dense<0.000000e+00> : vector<1x128xf32>
    %146 = tpu.matmul %139, %145, %cst_72 {dimension_numbers = #tpu.dot_dimension_numbers<[1], [0], [0], [1], [0, 0, 1, 1], [], []>} : vector<1x16xbf16>, vector<16x128xbf16>, vector<1x128xf32> -> vector<1x128xf32>
    %147 = arith.addf %144, %146 : vector<1x128xf32>
    %c32_73 = arith.constant 32 : index
    %c0_74 = arith.constant 0 : index
    %148 = vector.load %arg10[%c32_73, %c0_74] : memref<64x128xbf16, #tpu.memory_space<vmem>>, vector<16x128xbf16>
    %cst_75 = arith.constant dense<0.000000e+00> : vector<1x128xf32>
    %149 = tpu.matmul %142, %148, %cst_75 {dimension_numbers = #tpu.dot_dimension_numbers<[1], [0], [0], [1], [0, 0, 1, 1], [], []>} : vector<1x16xbf16>, vector<16x128xbf16>, vector<1x128xf32> -> vector<1x128xf32>
    %150 = arith.addf %147, %149 : vector<1x128xf32>
    %c48_76 = arith.constant 48 : index
    %c0_77 = arith.constant 0 : index
    %151 = vector.load %arg10[%c48_76, %c0_77] : memref<64x128xbf16, #tpu.memory_space<vmem>>, vector<1x128xbf16>
    %152 = arith.extf %151 : vector<1x128xbf16> to vector<1x128xf32>
    %153 = arith.addf %150, %152 : vector<1x128xf32>
    %cst_78 = arith.constant 0.000000e+00 : f32
    %154 = vector.broadcast %cst_78 : f32 to vector<1x128xf32>
    %155 = arith.maximumf %153, %154 : vector<1x128xf32>
    %156 = arith.truncf %155 : vector<1x128xf32> to vector<1x128xbf16>
    %c0_79 = arith.constant 0 : index
    %c0_80 = arith.constant 0 : index
    %157 = vector.load %arg11[%c0_79, %c0_80] : memref<144x16xbf16, #tpu.memory_space<vmem>>, vector<128x16xbf16>
    %cst_81 = arith.constant dense<0.000000e+00> : vector<1x16xf32>
    %158 = tpu.matmul %156, %157, %cst_81 {dimension_numbers = #tpu.dot_dimension_numbers<[1], [0], [0], [1], [0, 0, 1, 1], [], []>} : vector<1x128xbf16>, vector<128x16xbf16>, vector<1x16xf32> -> vector<1x16xf32>
    %c128_82 = arith.constant 128 : index
    %c0_83 = arith.constant 0 : index
    %159 = vector.load %arg11[%c128_82, %c0_83] : memref<144x16xbf16, #tpu.memory_space<vmem>>, vector<1x16xbf16>
    %160 = arith.extf %159 : vector<1x16xbf16> to vector<1x16xf32>
    %161 = arith.addf %158, %160 : vector<1x16xf32>
    %cst_84 = arith.constant 0.000000e+00 : f32
    %162 = vector.broadcast %cst_84 : f32 to vector<1x16xf32>
    %163 = arith.maximumf %161, %162 : vector<1x16xf32>
    %c0_85 = arith.constant 0 : index
    %c0_86 = arith.constant 0 : index
    %164 = vector.load %arg14[%c0_85, %c0_86] : memref<1x16xf32, #tpu.memory_space<vmem>>, vector<1x16xf32>
    tpu.vector_store %arg14[%c0_85, %c0_86], %163 {strides = array<i32>} : memref<1x16xf32, #tpu.memory_space<vmem>>, vector<1x16xf32>,
    return
  }
  func.func @transform_0(%arg0: i32) -> (i32, i32) {
    %c0_i32 = arith.constant 0 : i32
    %c0_i32_0 = arith.constant 0 : i32
    %c0_i32_1 = arith.constant 0 : i32
    return %c0_i32, %c0_i32_0 : i32, i32
  }
  func.func @transform_1(%arg0: i32) -> (i32, i32) {
    %c0_i32 = arith.constant 0 : i32
    %c0_i32_0 = arith.constant 0 : i32
    %c0_i32_1 = arith.constant 0 : i32
    return %c0_i32, %c0_i32_0 : i32, i32
  }
  func.func @transform_2(%arg0: i32) -> (i32, i32) {
    %c0_i32 = arith.constant 0 : i32
    %c0_i32_0 = arith.constant 0 : i32
    %c0_i32_1 = arith.constant 0 : i32
    return %c0_i32, %c0_i32_0 : i32, i32
  }
  func.func @transform_3(%arg0: i32) -> (i32, i32) {
    %c0_i32 = arith.constant 0 : i32
    %c0_i32_0 = arith.constant 0 : i32
    %c0_i32_1 = arith.constant 0 : i32
    return %c0_i32, %c0_i32_0 : i32, i32
  }
  func.func @transform_4(%arg0: i32) -> (i32, i32) {
    %c0_i32 = arith.constant 0 : i32
    %c0_i32_0 = arith.constant 0 : i32
    %c0_i32_1 = arith.constant 0 : i32
    return %c0_i32, %c0_i32_0 : i32, i32
  }
  func.func @transform_5(%arg0: i32) -> (i32, i32) {
    %c0_i32 = arith.constant 0 : i32
    %c0_i32_0 = arith.constant 0 : i32
    %c0_i32_1 = arith.constant 0 : i32
    return %c0_i32, %c0_i32_0 : i32, i32
  }
  func.func @transform_6(%arg0: i32) -> (i32, i32) {
    %c0_i32 = arith.constant 0 : i32
    %c0_i32_0 = arith.constant 0 : i32
    %c0_i32_1 = arith.constant 0 : i32
    return %c0_i32, %c0_i32_0 : i32, i32
  }
  func.func @transform_7(%arg0: i32) -> (i32, i32) {
    %c0_i32 = arith.constant 0 : i32
    %c0_i32_0 = arith.constant 0 : i32
    %c0_i32_1 = arith.constant 0 : i32
    return %c0_i32, %c0_i32_0 : i32, i32
  }
  func.func @transform_8(%arg0: i32) -> (i32, i32) {
    %c0_i32 = arith.constant 0 : i32
    %c0_i32_0 = arith.constant 0 : i32
    %c0_i32_1 = arith.constant 0 : i32
    return %c0_i32, %c0_i32_0 : i32, i32
  }
  func.func @transform_9(%arg0: i32) -> (i32, i32) {
    %c0_i32 = arith.constant 0 : i32
    %c0_i32_0 = arith.constant 0 : i32
    %c0_i32_1 = arith.constant 0 : i32
    return %c0_i32, %c0_i32_0 : i32, i32
  }
  func.func @transform_10(%arg0: i32) -> (i32, i32) {
    %c0_i32 = arith.constant 0 : i32
    %c0_i32_0 = arith.constant 0 : i32
    %c0_i32_1 = arith.constant 0 : i32
    return %c0_i32, %c0_i32_0 : i32, i32
  }
  func.func @transform_11(%arg0: i32) -> (i32, i32) {
    %c0_i32 = arith.constant 0 : i32
    %c0_i32_0 = arith.constant 0 : i32
    %c0_i32_1 = arith.constant 0 : i32
    return %c0_i32, %c0_i32_0 : i32, i32
  }
  func.func @transform_12(%arg0: i32) -> (i32, i32) {
    %c0_i32 = arith.constant 0 : i32
    %c0_i32_0 = arith.constant 0 : i32
    %c0_i32_1 = arith.constant 0 : i32
    return %c0_i32, %c0_i32_0 : i32, i32
  }
  func.func @transform_13(%arg0: i32) -> (i32, i32) {
    %c0_i32 = arith.constant 0 : i32
    %c0_i32_0 = arith.constant 0 : i32
    %c0_i32_1 = arith.constant 0 : i32
    return %c0_i32, %c0_i32_0 : i32, i32
  }
}

</mosaic_0001>

<llo_original>
// kernel: tpu_custom_call.1
$region0: #{tpu_custom_call.1}
  #allocation0 [shape = 'u32[]', space=smem, size = 0x4, offset = 0x4, fixed_abs, tag = 'smem constant byte address 0x4 - core index']
  #allocation1 [shape = 'u32[144,128]{1,0:T(1,128)}', space=vmem, size = 0x12000, scoped, tag = 'internal scratch']
  %s0 = inlined_call_operand.vmem [shape: f32[8,16], index: 0, kind: input, shape index: {}]
  %s1 = inlined_call_operand.vmem [shape: f32[16,16], index: 1, kind: input, shape index: {}]
  %s2 = inlined_call_operand.vmem [shape: f32[1,16], index: 2, kind: input, shape index: {}]
  %s3 = inlined_call_operand.vmem [shape: s32[16,1], index: 3, kind: input, shape index: {}]
  %s4 = inlined_call_operand.vmem [shape: s32[16,1], index: 4, kind: input, shape index: {}]
  %s5 = inlined_call_operand.vmem [shape: bf16[80,128], index: 5, kind: input, shape index: {}]
  %s6 = inlined_call_operand.vmem [shape: bf16[176,16], index: 6, kind: input, shape index: {}]
  %s7 = inlined_call_operand.vmem [shape: bf16[64,128], index: 7, kind: input, shape index: {}]
  %s8 = inlined_call_operand.vmem [shape: bf16[176,16], index: 8, kind: input, shape index: {}]
  %s9 = inlined_call_operand.vmem [shape: bf16[64,128], index: 9, kind: input, shape index: {}]
  %s10 = inlined_call_operand.vmem [shape: bf16[144,16], index: 10, kind: input, shape index: {}]
  %s11 = inlined_call_operand.hbm [shape: f32[16,16], index: 11, kind: output, shape index: {0}]
  %s12 = inlined_call_operand.hbm [shape: f32[8,16], index: 12, kind: output, shape index: {1}]
  %s13 = inlined_call_operand.hbm [shape: f32[1,16], index: 13, kind: output, shape index: {2}]
  %14 = xla_tuple %s11, %s12, %s13
  %s15 = sld [smem:[#allocation0]]
  $region70: #{tpu_custom_call.1} parent=0
    _
  %s17 = ssub.s32 1, %s15
  %s18 = scalar_select 0, %s17, %s15
  $region1: #{tpu_custom_call.1} parent=0
    #allocation2 [shape = 'u8[8192]{0}', space=vmem, size = 0x2000, scoped, tag = 'output window, operand 0, single buffered']
    #allocation3 [shape = 's32[1]{0}', space=sflag, size = 0x4, scoped, tag = 'scoped memory for tpu_custom_call.1']
    #allocation4 [shape = 'u8[4096]{0}', space=vmem, size = 0x1000, scoped, tag = 'output window, operand 1, single buffered']
    #allocation5 [shape = 's32[1]{0}', space=sflag, size = 0x4, scoped, tag = 'scoped memory for tpu_custom_call.1']
    #allocation6 [shape = 'u8[512]{0}', space=vmem, size = 0x400, scoped, tag = 'output window, operand 2, single buffered']
    %19 = vsyncpa [#allocation3], 0
    %20 = vsyncpa [#allocation5], 0
    // Predicated region
    $region2: #{tpu_custom_call.1} parent=1 // pred_check
      _
    $region3: #{tpu_custom_call.1} parent=1 // pred_check_branch
      %22 = sbr.rel (0) target = $region5
    $region4: #{tpu_custom_call.1} parent=1 // pred_region
      _
    $region5: #{tpu_custom_call.1} parent=1 // pred_fallthru
      _
    // Predicated region
    $region6: #{tpu_custom_call.1} parent=1 // pred_check
      _
    $region7: #{tpu_custom_call.1} parent=1 // pred_check_branch
      %24 = sbr.rel (0) target = $region9
    $region8: #{tpu_custom_call.1} parent=1 // pred_region
      _
    $region9: #{tpu_custom_call.1} parent=1 // pred_fallthru
      _
    // Predicated region
    $region10: #{tpu_custom_call.1} parent=1 // pred_check
      _
    $region11: #{tpu_custom_call.1} parent=1 // pred_check_branch
      %26 = sbr.rel (0) target = $region13
    $region12: #{tpu_custom_call.1} parent=1 // pred_region
      _
    $region13: #{tpu_custom_call.1} parent=1 // pred_fallthru
      _
    // Predicated region
    $region14: #{tpu_custom_call.1} parent=1 // pred_check
      _
    $region15: #{tpu_custom_call.1} parent=1 // pred_check_branch
      %28 = sbr.rel (0) target = $region17
    $region16: #{tpu_custom_call.1} parent=1 // pred_region
      _
    $region17: #{tpu_custom_call.1} parent=1 // pred_fallthru
      _
    // Predicated region
    $region18: #{tpu_custom_call.1} parent=1 // pred_check
      _
    $region19: #{tpu_custom_call.1} parent=1 // pred_check_branch
      %30 = sbr.rel (0) target = $region21
    $region20: #{tpu_custom_call.1} parent=1 // pred_region
      _
    $region21: #{tpu_custom_call.1} parent=1 // pred_fallthru
      _
    // Predicated region
    $region22: #{tpu_custom_call.1} parent=1 // pred_check
      _
    $region23: #{tpu_custom_call.1} parent=1 // pred_check_branch
      %32 = sbr.rel (0) target = $region25
    $region24: #{tpu_custom_call.1} parent=1 // pred_region
      _
    $region25: #{tpu_custom_call.1} parent=1 // pred_fallthru
      _
    // Predicated region
    $region26: #{tpu_custom_call.1} parent=1 // pred_check
      _
    $region27: #{tpu_custom_call.1} parent=1 // pred_check_branch
      %34 = sbr.rel (0) target = $region29
    $region28: #{tpu_custom_call.1} parent=1 // pred_region
      _
    $region29: #{tpu_custom_call.1} parent=1 // pred_fallthru
      _
    // Predicated region
    $region30: #{tpu_custom_call.1} parent=1 // pred_check
      _
    $region31: #{tpu_custom_call.1} parent=1 // pred_check_branch
      %36 = sbr.rel (0) target = $region33
    $region32: #{tpu_custom_call.1} parent=1 // pred_region
      _
    $region33: #{tpu_custom_call.1} parent=1 // pred_fallthru
      _
    // Predicated region
    $region34: #{tpu_custom_call.1} parent=1 // pred_check
      _
    $region35: #{tpu_custom_call.1} parent=1 // pred_check_branch
      %38 = sbr.rel (0) target = $region37
    $region36: #{tpu_custom_call.1} parent=1 // pred_region
      _
    $region37: #{tpu_custom_call.1} parent=1 // pred_fallthru
      _
    // Predicated region
    $region38: #{tpu_custom_call.1} parent=1 // pred_check
      _
    $region39: #{tpu_custom_call.1} parent=1 // pred_check_branch
      %40 = sbr.rel (0) target = $region41
    $region40: #{tpu_custom_call.1} parent=1 // pred_region
      _
    $region41: #{tpu_custom_call.1} parent=1 // pred_fallthru
      _
    // Predicated region
    $region42: #{tpu_custom_call.1} parent=1 // pred_check
      _
    $region43: #{tpu_custom_call.1} parent=1 // pred_check_branch
      %42 = sbr.rel (0) target = $region45
    $region44: #{tpu_custom_call.1} parent=1 // pred_region
      _
    $region45: #{tpu_custom_call.1} parent=1 // pred_fallthru
      _
    %v44 = vld [vmem:[%s0] sm:$0xff]
    %v45 = vld [vmem:[%s1] sm:$0xff]
    %v46 = vld [vmem:[%s1 + $0x8] sm:$0xff]
    %v47 = vld [vmem:[%s2] sm:$0x1]
    %v48 = vpack.c.bf16 %v44, %v44
    %v49 = vpack.c.bf16 %v46, %v45
    %v50 = vpack.c.bf16 %v47, %v47
    %v51 = vlaneseq
    %v52 = vand.u32 %v51, 127
    %v53 = vld [vmem:[%s3] sm:$0xff]
    %v54 = vld [vmem:[%s3 + $0x8] sm:$0xff]
    %55 = vset.pattern.permute.xlu0 0
    %56 = vperm.xlu0 %55, %v53
    %v57 = vpop.permute.xlu0 %56
    %58 = vset.pattern.permute.xlu0 0
    %59 = vperm.xlu0 %58, %v54
    %v60 = vpop.permute.xlu0 %59
    %vm61 = vcmp.eq.s32.totalorder %v52, %v57
    %vm62 = vcmp.eq.s32.totalorder %v52, %v60
    %v63 = vsel %vm61, 1, 0
    %v64 = vsel %vm62, 1, 0
    %v65 = vcvt.s32.f32 %v63
    %v66 = vcvt.s32.f32 %v64
    %v67 = vpack.c.bf16 %v66, %v65
    %v68 = vld [vmem:[%s4] sm:$0xff]
    %v69 = vld [vmem:[%s4 + $0x8] sm:$0xff]
    %70 = vset.pattern.permute.xlu0 0
    %71 = vperm.xlu0 %70, %v68
    %v72 = vpop.permute.xlu0 %71
    %73 = vset.pattern.permute.xlu0 0
    %74 = vperm.xlu0 %73, %v69
    %v75 = vpop.permute.xlu0 %74
    %vm76 = vcmp.eq.s32.totalorder %v52, %v72
    %vm77 = vcmp.eq.s32.totalorder %v52, %v75
    %v78 = vsel %vm76, 1, 0
    %v79 = vsel %vm77, 1, 0
    %v80 = vcvt.s32.f32 %v78
    %v81 = vcvt.s32.f32 %v79
    %v82 = vpack.c.bf16 %v81, %v80
    %vm83 = vcmask 64512
    %v85 = vsel %vm83, %v67, 0
    %vm87 = vcmask 1043456
    %v89 = vsel %vm87, %v48, 0
    %91 = vmatprep.subr.bf16.mxu0 0
    %92 = vmatpush1.bf16.msra.mxu0 %v89
    %93 = vmatprep.subr.bf16.mxu0 0
    %94 = vmatpush1.bf16.msra.mxu0 0
    %95 = vmatprep.subr.bf16.mxu0 0
    %96 = vmatpush1.bf16.msra.mxu0 0
    %97 = vmatprep.subr.bf16.mxu0 0
    %98 = vmatpush1.bf16.msra.mxu0 0
    %99 = vmatprep.subr.bf16.mxu0 0
    %100 = vmatpush1.bf16.msra.mxu0 0
    %101 = vmatprep.subr.bf16.mxu0 0
    %102 = vmatpush1.bf16.msra.mxu0 0
    %103 = vmatprep.subr.bf16.mxu0 0
    %104 = vmatpush1.bf16.msra.mxu0 0
    %105 = vmatprep.subr.bf16.mxu0 0
    %106 = vmatpush1.bf16.msra.mxu0 0
    %107 = vmatprep.subr.bf16.mxu0 0
    %108 = vmatpush1.bf16.msra.mxu0 0
    %109 = vmatprep.subr.bf16.mxu0 0
    %110 = vmatpush1.bf16.msra.mxu0 0
    %111 = vmatprep.subr.bf16.mxu0 0
    %112 = vmatpush1.bf16.msra.mxu0 0
    %113 = vmatprep.subr.bf16.mxu0 0
    %114 = vmatpush1.bf16.msra.mxu0 0
    %115 = vmatprep.subr.bf16.mxu0 0
    %116 = vmatpush1.bf16.msra.mxu0 0
    %117 = vmatprep.subr.bf16.mxu0 0
    %118 = vmatpush1.bf16.msra.mxu0 0
    %119 = vmatprep.subr.bf16.mxu0 0
    %120 = vmatpush1.bf16.msra.mxu0 0
    %121 = vmatprep.subr.bf16.mxu0 0
    %122 = vmatpush1.bf16.msra.mxu0 0
    %123 = vmatprep.mubr.bf16.mxu0 0
    %124 = vmatmul.mubr.bf16.gmra.mrb[0].mxu0 %v85
    %v125 = vpop.f32.mrb[0].mxu0
    %v126 = vadd.f32 0.0, %v125
    %v127 = vpop.f32.mrb[0].mxu0
    %v128 = vpop.f32.mrb[0].mxu0
    %v129 = vadd.f32 0.0, %v128
    %v130 = vpop.f32.mrb[0].mxu0
    %131 = vdwg.mxu0
    %v132 = vpack.c.bf16 %v129, %v126
    %v134 = vsel %vm83, %v82, 0
    %136 = vmatprep.subr.bf16.mxu0 0
    %137 = vmatpush1.bf16.msra.mxu0 %v89
    %138 = vmatprep.subr.bf16.mxu0 0
    %139 = vmatpush1.bf16.msra.mxu0 0
    %140 = vmatprep.subr.bf16.mxu0 0
    %141 = vmatpush1.bf16.msra.mxu0 0
    %142 = vmatprep.subr.bf16.mxu0 0
    %143 = vmatpush1.bf16.msra.mxu0 0
    %144 = vmatprep.subr.bf16.mxu0 0
    %145 = vmatpush1.bf16.msra.mxu0 0
    %146 = vmatprep.subr.bf16.mxu0 0
    %147 = vmatpush1.bf16.msra.mxu0 0
    %148 = vmatprep.subr.bf16.mxu0 0
    %149 = vmatpush1.bf16.msra.mxu0 0
    %150 = vmatprep.subr.bf16.mxu0 0
    %151 = vmatpush1.bf16.msra.mxu0 0
    %152 = vmatprep.subr.bf16.mxu0 0
    %153 = vmatpush1.bf16.msra.mxu0 0
    %154 = vmatprep.subr.bf16.mxu0 0
    %155 = vmatpush1.bf16.msra.mxu0 0
    %156 = vmatprep.subr.bf16.mxu0 0
    %157 = vmatpush1.bf16.msra.mxu0 0
    %158 = vmatprep.subr.bf16.mxu0 0
    %159 = vmatpush1.bf16.msra.mxu0 0
    %160 = vmatprep.subr.bf16.mxu0 0
    %161 = vmatpush1.bf16.msra.mxu0 0
    %162 = vmatprep.subr.bf16.mxu0 0
    %163 = vmatpush1.bf16.msra.mxu0 0
    %164 = vmatprep.subr.bf16.mxu0 0
    %165 = vmatpush1.bf16.msra.mxu0 0
    %166 = vmatprep.subr.bf16.mxu0 0
    %167 = vmatpush1.bf16.msra.mxu0 0
    %168 = vmatprep.mubr.bf16.mxu0 0
    %169 = vmatmul.mubr.bf16.gmra.mrb[0].mxu0 %v134
    %v170 = vpop.f32.mrb[0].mxu0
    %v171 = vadd.f32 0.0, %v170
    %v172 = vpop.f32.mrb[0].mxu0
    %v173 = vpop.f32.mrb[0].mxu0
    %v174 = vadd.f32 0.0, %v173
    %v175 = vpop.f32.mrb[0].mxu0
    %176 = vdwg.mxu0
    %v177 = vpack.c.bf16 %v174, %v171
    %v178 = vld [vmem:[%s5 + $0x18] sm:$0xf]
    %v179 = vld [vmem:[%s5 + $0x1c] sm:$0xf]
    %v180 = vld [vmem:[%s5 + $0x20] sm:$0x1]
    %v181 = vunpack.c.l.bf16 %v180
    %v184 = vunpack.c.l.b16 %v178
    %v185 = vunpack.c.l.b16 %v179
    %v186 = vpack.c.b16 %v185, %v184
    %vm188 = vcmask 130048
    %v190 = vsel %vm188, %v50, 0
    %192 = vmatprep.subr.bf16.mxu0 0
    %193 = vmatpush1.bf16.msra.mxu0 %v186
    %194 = vmatprep.subr.bf16.mxu0 0
    %195 = vmatpush1.bf16.msra.mxu0 0
    %196 = vmatprep.subr.bf16.mxu0 0
    %197 = vmatpush1.bf16.msra.mxu0 0
    %198 = vmatprep.subr.bf16.mxu0 0
    %199 = vmatpush1.bf16.msra.mxu0 0
    %200 = vmatprep.subr.bf16.mxu0 0
    %201 = vmatpush1.bf16.msra.mxu0 0
    %202 = vmatprep.subr.bf16.mxu0 0
    %203 = vmatpush1.bf16.msra.mxu0 0
    %204 = vmatprep.subr.bf16.mxu0 0
    %205 = vmatpush1.bf16.msra.mxu0 0
    %206 = vmatprep.subr.bf16.mxu0 0
    %207 = vmatpush1.bf16.msra.mxu0 0
    %208 = vmatprep.subr.bf16.mxu0 0
    %209 = vmatpush1.bf16.msra.mxu0 0
    %210 = vmatprep.subr.bf16.mxu0 0
    %211 = vmatpush1.bf16.msra.mxu0 0
    %212 = vmatprep.subr.bf16.mxu0 0
    %213 = vmatpush1.bf16.msra.mxu0 0
    %214 = vmatprep.subr.bf16.mxu0 0
    %215 = vmatpush1.bf16.msra.mxu0 0
    %216 = vmatprep.subr.bf16.mxu0 0
    %217 = vmatpush1.bf16.msra.mxu0 0
    %218 = vmatprep.subr.bf16.mxu0 0
    %219 = vmatpush1.bf16.msra.mxu0 0
    %220 = vmatprep.subr.bf16.mxu0 0
    %221 = vmatpush1.bf16.msra.mxu0 0
    %222 = vmatprep.subr.bf16.mxu0 0
    %223 = vmatpush1.bf16.msra.mxu0 0
    %224 = vmatprep.mubr.bf16.mxu0 0
    %225 = vmatmul.mubr.bf16.gmra.mrb[0].mxu0 %v190
    %v226 = vpop.f32.mrb[0].mxu0
    %v227 = vadd.f32 %v181, %v226
    %v228 = vpop.f32.mrb[0].mxu0
    %v229 = vpop.f32.mrb[0].mxu0
    %v230 = vpop.f32.mrb[0].mxu0
    %231 = vdwg.mxu0
    %v232 = vld [vmem:[%s5] sm:$0xf]
    %v233 = vld [vmem:[%s5 + $0x4] sm:$0xf]
    %v234 = vld [vmem:[%s5 + $0x8] sm:$0xf]
    %v235 = vld [vmem:[%s5 + $0xc] sm:$0xf]
    %v238 = vunpack.c.l.b16 %v234
    %v239 = vunpack.c.l.b16 %v235
    %v240 = vpack.c.b16 %v239, %v238
    %v243 = vsel %vm188, %v132, 0
    %245 = vmatprep.subr.bf16.mxu0 0
    %246 = vmatpush1.bf16.msra.mxu0 %v240
    %247 = vmatprep.subr.bf16.mxu0 0
    %248 = vmatpush1.bf16.msra.mxu0 0
    %249 = vmatprep.subr.bf16.mxu0 0
    %250 = vmatpush1.bf16.msra.mxu0 0
    %251 = vmatprep.subr.bf16.mxu0 0
    %252 = vmatpush1.bf16.msra.mxu0 0
    %253 = vmatprep.subr.bf16.mxu0 0
    %254 = vmatpush1.bf16.msra.mxu0 0
    %255 = vmatprep.subr.bf16.mxu0 0
    %256 = vmatpush1.bf16.msra.mxu0 0
    %257 = vmatprep.subr.bf16.mxu0 0
    %258 = vmatpush1.bf16.msra.mxu0 0
    %259 = vmatprep.subr.bf16.mxu0 0
    %260 = vmatpush1.bf16.msra.mxu0 0
    %261 = vmatprep.subr.bf16.mxu0 0
    %262 = vmatpush1.bf16.msra.mxu0 0
    %263 = vmatprep.subr.bf16.mxu0 0
    %264 = vmatpush1.bf16.msra.mxu0 0
    %265 = vmatprep.subr.bf16.mxu0 0
    %266 = vmatpush1.bf16.msra.mxu0 0
    %267 = vmatprep.subr.bf16.mxu0 0
    %268 = vmatpush1.bf16.msra.mxu0 0
    %269 = vmatprep.subr.bf16.mxu0 0
    %270 = vmatpush1.bf16.msra.mxu0 0
    %271 = vmatprep.subr.bf16.mxu0 0
    %272 = vmatpush1.bf16.msra.mxu0 0
    %273 = vmatprep.subr.bf16.mxu0 0
    %274 = vmatpush1.bf16.msra.mxu0 0
    %275 = vmatprep.subr.bf16.mxu0 0
    %276 = vmatpush1.bf16.msra.mxu0 0
    %277 = vmatprep.mubr.bf16.mxu0 0
    %278 = vmatmul.mubr.bf16.gmra.mrb[0].mxu0 %v243
    %v279 = vpop.f32.mrb[0].mxu0
    %v280 = vadd.f32 0.0, %v279
    %v281 = vpop.f32.mrb[0].mxu0
    %v282 = vpop.f32.mrb[0].mxu0
    %v283 = vadd.f32 0.0, %v282
    %v284 = vpop.f32.mrb[0].mxu0
    %285 = vdwg.mxu0
    %v288 = vunpack.c.l.b16 %v232
    %v289 = vunpack.c.l.b16 %v233
    %v290 = vpack.c.b16 %v289, %v288
    %v293 = vsel %vm188, %v49, 0
    %295 = vmatprep.subr.bf16.mxu0 0
    %296 = vmatpush1.bf16.msra.mxu0 %v290
    %297 = vmatprep.subr.bf16.mxu0 0
    %298 = vmatpush1.bf16.msra.mxu0 0
    %299 = vmatprep.subr.bf16.mxu0 0
    %300 = vmatpush1.bf16.msra.mxu0 0
    %301 = vmatprep.subr.bf16.mxu0 0
    %302 = vmatpush1.bf16.msra.mxu0 0
    %303 = vmatprep.subr.bf16.mxu0 0
    %304 = vmatpush1.bf16.msra.mxu0 0
    %305 = vmatprep.subr.bf16.mxu0 0
    %306 = vmatpush1.bf16.msra.mxu0 0
    %307 = vmatprep.subr.bf16.mxu0 0
    %308 = vmatpush1.bf16.msra.mxu0 0
    %309 = vmatprep.subr.bf16.mxu0 0
    %310 = vmatpush1.bf16.msra.mxu0 0
    %311 = vmatprep.subr.bf16.mxu0 0
    %312 = vmatpush1.bf16.msra.mxu0 0
    %313 = vmatprep.subr.bf16.mxu0 0
    %314 = vmatpush1.bf16.msra.mxu0 0
    %315 = vmatprep.subr.bf16.mxu0 0
    %316 = vmatpush1.bf16.msra.mxu0 0
    %317 = vmatprep.subr.bf16.mxu0 0
    %318 = vmatpush1.bf16.msra.mxu0 0
    %319 = vmatprep.subr.bf16.mxu0 0
    %320 = vmatpush1.bf16.msra.mxu0 0
    %321 = vmatprep.subr.bf16.mxu0 0
    %322 = vmatpush1.bf16.msra.mxu0 0
    %323 = vmatprep.subr.bf16.mxu0 0
    %324 = vmatpush1.bf16.msra.mxu0 0
    %325 = vmatprep.subr.bf16.mxu0 0
    %326 = vmatpush1.bf16.msra.mxu0 0
    %327 = vmatprep.mubr.bf16.mxu0 0
    %328 = vmatmul.mubr.bf16.gmra.mrb[0].mxu0 %v293
    %v329 = vpop.f32.mrb[0].mxu0
    %v330 = vadd.f32 %v280, %v329
    %v331 = vpop.f32.mrb[0].mxu0
    %v332 = vpop.f32.mrb[0].mxu0
    %v333 = vadd.f32 %v283, %v332
    %v334 = vpop.f32.mrb[0].mxu0
    %335 = vdwg.mxu0
    %v336 = vld [vmem:[%s5 + $0x10] sm:$0xf]
    %v337 = vld [vmem:[%s5 + $0x14] sm:$0xf]
    %v340 = vunpack.c.l.b16 %v336
    %v341 = vunpack.c.l.b16 %v337
    %v342 = vpack.c.b16 %v341, %v340
    %v345 = vsel %vm188, %v177, 0
    %347 = vmatprep.subr.bf16.mxu0 0
    %348 = vmatpush1.bf16.msra.mxu0 %v342
    %349 = vmatprep.subr.bf16.mxu0 0
    %350 = vmatpush1.bf16.msra.mxu0 0
    %351 = vmatprep.subr.bf16.mxu0 0
    %352 = vmatpush1.bf16.msra.mxu0 0
    %353 = vmatprep.subr.bf16.mxu0 0
    %354 = vmatpush1.bf16.msra.mxu0 0
    %355 = vmatprep.subr.bf16.mxu0 0
    %356 = vmatpush1.bf16.msra.mxu0 0
    %357 = vmatprep.subr.bf16.mxu0 0
    %358 = vmatpush1.bf16.msra.mxu0 0
    %359 = vmatprep.subr.bf16.mxu0 0
    %360 = vmatpush1.bf16.msra.mxu0 0
    %361 = vmatprep.subr.bf16.mxu0 0
    %362 = vmatpush1.bf16.msra.mxu0 0
    %363 = vmatprep.subr.bf16.mxu0 0
    %364 = vmatpush1.bf16.msra.mxu0 0
    %365 = vmatprep.subr.bf16.mxu0 0
    %366 = vmatpush1.bf16.msra.mxu0 0
    %367 = vmatprep.subr.bf16.mxu0 0
    %368 = vmatpush1.bf16.msra.mxu0 0
    %369 = vmatprep.subr.bf16.mxu0 0
    %370 = vmatpush1.bf16.msra.mxu0 0
    %371 = vmatprep.subr.bf16.mxu0 0
    %372 = vmatpush1.bf16.msra.mxu0 0
    %373 = vmatprep.subr.bf16.mxu0 0
    %374 = vmatpush1.bf16.msra.mxu0 0
    %375 = vmatprep.subr.bf16.mxu0 0
    %376 = vmatpush1.bf16.msra.mxu0 0
    %377 = vmatprep.subr.bf16.mxu0 0
    %378 = vmatpush1.bf16.msra.mxu0 0
    %379 = vmatprep.mubr.bf16.mxu0 0
    %380 = vmatmul.mubr.bf16.gmra.mrb[0].mxu0 %v345
    %v381 = vpop.f32.mrb[0].mxu0
    %v382 = vadd.f32 0.0, %v381
    %v383 = vpop.f32.mrb[0].mxu0
    %v384 = vpop.f32.mrb[0].mxu0
    %v385 = vadd.f32 0.0, %v384
    %v386 = vpop.f32.mrb[0].mxu0
    %387 = vdwg.mxu0
    %v388 = vadd.f32 %v330, %v382
    %v389 = vadd.f32 %v333, %v385
    %v390 = vlaneseq
    %v391 = vshrl.u32 %v390, 7
    %v392 = vsub.s32 0, %v391
    %v393 = vrot.slane %v227, %v392
    %v394 = vadd.f32 %v388, %v393
    %v395 = vadd.f32 %v389, %v393
    %v396 = vmax.f32 %v394, 0.0
    %v397 = vmax.f32 %v395, 0.0
    %v398 = vpack.c.bf16 %v397, %v396
    %v399 = vld [vmem:[%s6] sm:$0xf]
    %v400 = vld [vmem:[%s6 + $0x4] sm:$0xf]
    %v401 = vld [vmem:[%s6 + $0x8] sm:$0xf]
    %v402 = vld [vmem:[%s6 + $0xc] sm:$0xf]
    %v403 = vld [vmem:[%s6 + $0x10] sm:$0xf]
    %v404 = vld [vmem:[%s6 + $0x14] sm:$0xf]
    %v405 = vld [vmem:[%s6 + $0x18] sm:$0xf]
    %v406 = vld [vmem:[%s6 + $0x1c] sm:$0xf]
    %v407 = vld [vmem:[%s6 + $0x20] sm:$0xf]
    %v408 = vld [vmem:[%s6 + $0x24] sm:$0xf]
    %v409 = vld [vmem:[%s6 + $0x28] sm:$0xf]
    %v410 = vld [vmem:[%s6 + $0x2c] sm:$0xf]
    %v411 = vld [vmem:[%s6 + $0x30] sm:$0xf]
    %v412 = vld [vmem:[%s6 + $0x34] sm:$0xf]
    %v413 = vld [vmem:[%s6 + $0x38] sm:$0xf]
    %v414 = vld [vmem:[%s6 + $0x3c] sm:$0xf]
    %v415 = vld [vmem:[%s6 + $0x40] sm:$0x1]
    %v416 = vunpack.c.l.bf16 %v415
    %v417 = vlaneseq
    %v418 = vshrl.u32 %v417, 7
    %v419 = vsub.s32 0, %v418
    %v420 = vrot.slane %v416, %v419
    %v437 = vunpack.c.l.b16 %v399
    %v438 = vunpack.c.l.b16 %v400
    %v439 = vunpack.c.l.b16 %v401
    %v440 = vunpack.c.l.b16 %v402
    %v441 = vunpack.c.l.b16 %v403
    %v442 = vunpack.c.l.b16 %v404
    %v443 = vunpack.c.l.b16 %v405
    %v444 = vunpack.c.l.b16 %v406
    %v445 = vunpack.c.l.b16 %v407
    %v446 = vunpack.c.l.b16 %v408
    %v447 = vunpack.c.l.b16 %v409
    %v448 = vunpack.c.l.b16 %v410
    %v449 = vunpack.c.l.b16 %v411
    %v450 = vunpack.c.l.b16 %v412
    %v451 = vunpack.c.l.b16 %v413
    %v452 = vunpack.c.l.b16 %v414
    %v453 = vpack.c.b16 %v438, %v437
    %v454 = vpack.c.b16 %v440, %v439
    %v455 = vpack.c.b16 %v442, %v441
    %v456 = vpack.c.b16 %v444, %v443
    %v457 = vpack.c.b16 %v446, %v445
    %v458 = vpack.c.b16 %v448, %v447
    %v459 = vpack.c.b16 %v450, %v449
    %v460 = vpack.c.b16 %v452, %v451
    %469 = vmatprep.subr.bf16.mxu0 0
    %470 = vmatpush1.bf16.msra.mxu0 %v453
    %471 = vmatprep.subr.bf16.mxu0 0
    %472 = vmatpush1.bf16.msra.mxu0 %v454
    %473 = vmatprep.subr.bf16.mxu0 0
    %474 = vmatpush1.bf16.msra.mxu0 %v455
    %475 = vmatprep.subr.bf16.mxu0 0
    %476 = vmatpush1.bf16.msra.mxu0 %v456
    %477 = vmatprep.subr.bf16.mxu0 0
    %478 = vmatpush1.bf16.msra.mxu0 %v457
    %479 = vmatprep.subr.bf16.mxu0 0
    %480 = vmatpush1.bf16.msra.mxu0 %v458
    %481 = vmatprep.subr.bf16.mxu0 0
    %482 = vmatpush1.bf16.msra.mxu0 %v459
    %483 = vmatprep.subr.bf16.mxu0 0
    %484 = vmatpush1.bf16.msra.mxu0 %v460
    %485 = vmatprep.subr.bf16.mxu0 0
    %486 = vmatpush1.bf16.msra.mxu0 0
    %487 = vmatprep.subr.bf16.mxu0 0
    %488 = vmatpush1.bf16.msra.mxu0 0
    %489 = vmatprep.subr.bf16.mxu0 0
    %490 = vmatpush1.bf16.msra.mxu0 0
    %491 = vmatprep.subr.bf16.mxu0 0
    %492 = vmatpush1.bf16.msra.mxu0 0
    %493 = vmatprep.subr.bf16.mxu0 0
    %494 = vmatpush1.bf16.msra.mxu0 0
    %495 = vmatprep.subr.bf16.mxu0 0
    %496 = vmatpush1.bf16.msra.mxu0 0
    %497 = vmatprep.subr.bf16.mxu0 0
    %498 = vmatpush1.bf16.msra.mxu0 0
    %499 = vmatprep.subr.bf16.mxu0 0
    %500 = vmatpush1.bf16.msra.mxu0 0
    %501 = vmatprep.mubr.bf16.mxu0 0
    %502 = vmatmul.mubr.bf16.gmra.mrb[0].mxu0 %v398
    %v503 = vpop.f32.mrb[0].mxu0
    %v504 = vadd.f32 %v420, %v503
    %v505 = vpop.f32.mrb[0].mxu0
    %v506 = vpop.f32.mrb[0].mxu0
    %v507 = vadd.f32 %v420, %v506
    %v508 = vpop.f32.mrb[0].mxu0
    %509 = vdwg.mxu0
    %v510 = vmax.f32 %v504, 0.0
    %v511 = vmax.f32 %v507, 0.0
    %v512 = vld [vmem:[%s6 + $0x48] sm:$0x1]
    %v513 = vunpack.c.l.bf16 %v512
    %v514 = vld [vmem:[%s6 + $0x50] sm:$0x1]
    %v515 = vunpack.c.l.bf16 %v514
    %vm516 = vcmp.lt.s32.totalorder %v52, 5
    %v517 = vsel %vm516, 1, 0
    %v518 = vcvt.s32.f32 %v517
    %v519 = vsel %vm188, %v510, 0.0
    %520 = vadd.xlane.f32.xlu0 %v519
    %v521 = vpop.xlane.xlu0 %520
    %v522 = vsel %vm188, %v511, 0.0
    %523 = vadd.xlane.f32.xlu0 %v522
    %v524 = vpop.xlane.xlu0 %523
    %v525 = vmul.f32 %v521, 0.2
    %v526 = vmul.f32 %v524, 0.2
    %v527 = vsub.f32 %v510, %v525
    %v528 = vsub.f32 %v511, %v526
    %v529 = vmul.f32 %v527, %v518
    %v530 = vmul.f32 %v528, %v518
    %v531 = vmul.f32 %v529, %v529
    %v532 = vmul.f32 %v530, %v530
    %v533 = vsel %vm188, %v531, 0.0
    %534 = vadd.xlane.f32.xlu0 %v533
    %v535 = vpop.xlane.xlu0 %534
    %v536 = vsel %vm188, %v532, 0.0
    %537 = vadd.xlane.f32.xlu0 %v536
    %v538 = vpop.xlane.xlu0 %537
    %v539 = vmul.f32 %v535, 0.2
    %v540 = vmul.f32 %v538, 0.2
    %v541 = vadd.f32 %v539, 1e-05
    %v542 = vadd.f32 %v540, 1e-05
    %v543 = vrsqrt.pop %v541
    %v544 = vrsqrt.pop %v542
    %v545 = vmul.f32 %v529, %v543
    %v546 = vmul.f32 %v530, %v544
    %v547 = vlaneseq
    %v548 = vshrl.u32 %v547, 7
    %v549 = vsub.s32 0, %v548
    %v550 = vrot.slane %v513, %v549
    %v551 = vmul.f32 %v545, %v550
    %v552 = vmul.f32 %v546, %v550
    %v553 = vlaneseq
    %v554 = vshrl.u32 %v553, 7
    %v555 = vsub.s32 0, %v554
    %v556 = vrot.slane %v515, %v555
    %v557 = vadd.f32 %v551, %v556
    %v558 = vadd.f32 %v552, %v556
    %559 = vst.msk [vmem:[#allocation2] sm:$0xff] %vm188, %v557
    %560 = vst.msk [vmem:[#allocation2 + $0x8] sm:$0xff] %vm188, %v558
    %v561 = vpack.c.bf16 %v558, %v557
    %562 = vxpose.xlu0.c.b16.start [1/8] %v82, 128
    %563 = vxpose.xlu0.c.b16.cont [2/8] 0, 128
    %564 = vxpose.xlu0.c.b16.cont [3/8] 0, 128
    %565 = vxpose.xlu0.c.b16.cont [4/8] 0, 128
    %566 = vxpose.xlu0.c.b16.cont [5/8] 0, 128
    %567 = vxpose.xlu0.c.b16.cont [6/8] 0, 128
    %568 = vxpose.xlu0.c.b16.cont [7/8] 0, 128
    %569 = vxpose.xlu0.c.b16.end [8/8] 0, 128
    %v570 = vpop.trf.xlu0
    %v571 = vpop.trf.xlu0
    %v572 = vpop.trf.xlu0
    %v573 = vpop.trf.xlu0
    %v574 = vpop.trf.xlu0
    %v575 = vpop.trf.xlu0
    %v576 = vpop.trf.xlu0
    %v577 = vpop.trf.xlu0
    %v579 = vsel %vm188, %v570, 0
    %581 = vmatprep.subr.bf16.mxu0 0
    %582 = vmatpush1.bf16.msra.mxu0 %v561
    %583 = vmatprep.subr.bf16.mxu0 0
    %584 = vmatpush1.bf16.msra.mxu0 0
    %585 = vmatprep.subr.bf16.mxu0 0
    %586 = vmatpush1.bf16.msra.mxu0 0
    %587 = vmatprep.subr.bf16.mxu0 0
    %588 = vmatpush1.bf16.msra.mxu0 0
    %589 = vmatprep.subr.bf16.mxu0 0
    %590 = vmatpush1.bf16.msra.mxu0 0
    %591 = vmatprep.subr.bf16.mxu0 0
    %592 = vmatpush1.bf16.msra.mxu0 0
    %593 = vmatprep.subr.bf16.mxu0 0
    %594 = vmatpush1.bf16.msra.mxu0 0
    %595 = vmatprep.subr.bf16.mxu0 0
    %596 = vmatpush1.bf16.msra.mxu0 0
    %597 = vmatprep.subr.bf16.mxu0 0
    %598 = vmatpush1.bf16.msra.mxu0 0
    %599 = vmatprep.subr.bf16.mxu0 0
    %600 = vmatpush1.bf16.msra.mxu0 0
    %601 = vmatprep.subr.bf16.mxu0 0
    %602 = vmatpush1.bf16.msra.mxu0 0
    %603 = vmatprep.subr.bf16.mxu0 0
    %604 = vmatpush1.bf16.msra.mxu0 0
    %605 = vmatprep.subr.bf16.mxu0 0
    %606 = vmatpush1.bf16.msra.mxu0 0
    %607 = vmatprep.subr.bf16.mxu0 0
    %608 = vmatpush1.bf16.msra.mxu0 0
    %609 = vmatprep.subr.bf16.mxu0 0
    %610 = vmatpush1.bf16.msra.mxu0 0
    %611 = vmatprep.subr.bf16.mxu0 0
    %612 = vmatpush1.bf16.msra.mxu0 0
    %613 = vmatprep.mubr.bf16.mxu0 0
    %614 = vmatmul.mubr.bf16.gmra.mrb[0].mxu0 %v579
    %v615 = vpop.f32.mrb[0].mxu0
    %v616 = vadd.f32 0.0, %v615
    %v617 = vpop.f32.mrb[0].mxu0
    %v618 = vpop.f32.mrb[0].mxu0
    %v619 = vpop.f32.mrb[0].mxu0
    %620 = vdwg.mxu0
    %v621 = vpack.c.bf16 %v616, %v616
    %v622 = vld [vmem:[%s7 + $0x10] sm:$0xf]
    %v623 = vld [vmem:[%s7 + $0x14] sm:$0xf]
    %v624 = vld [vmem:[%s7 + $0x18] sm:$0x1]
    %v625 = vunpack.c.l.bf16 %v624
    %v628 = vunpack.c.l.b16 %v622
    %v629 = vunpack.c.l.b16 %v623
    %v630 = vpack.c.b16 %v629, %v628
    %632 = vmatprep.subr.bf16.mxu0 0
    %633 = vmatpush1.bf16.msra.mxu0 %v630
    %634 = vmatprep.subr.bf16.mxu0 0
    %635 = vmatpush1.bf16.msra.mxu0 0
    %636 = vmatprep.subr.bf16.mxu0 0
    %637 = vmatpush1.bf16.msra.mxu0 0
    %638 = vmatprep.subr.bf16.mxu0 0
    %639 = vmatpush1.bf16.msra.mxu0 0
    %640 = vmatprep.subr.bf16.mxu0 0
    %641 = vmatpush1.bf16.msra.mxu0 0
    %642 = vmatprep.subr.bf16.mxu0 0
    %643 = vmatpush1.bf16.msra.mxu0 0
    %644 = vmatprep.subr.bf16.mxu0 0
    %645 = vmatpush1.bf16.msra.mxu0 0
    %646 = vmatprep.subr.bf16.mxu0 0
    %647 = vmatpush1.bf16.msra.mxu0 0
    %648 = vmatprep.subr.bf16.mxu0 0
    %649 = vmatpush1.bf16.msra.mxu0 0
    %650 = vmatprep.subr.bf16.mxu0 0
    %651 = vmatpush1.bf16.msra.mxu0 0
    %652 = vmatprep.subr.bf16.mxu0 0
    %653 = vmatpush1.bf16.msra.mxu0 0
    %654 = vmatprep.subr.bf16.mxu0 0
    %655 = vmatpush1.bf16.msra.mxu0 0
    %656 = vmatprep.subr.bf16.mxu0 0
    %657 = vmatpush1.bf16.msra.mxu0 0
    %658 = vmatprep.subr.bf16.mxu0 0
    %659 = vmatpush1.bf16.msra.mxu0 0
    %660 = vmatprep.subr.bf16.mxu0 0
    %661 = vmatpush1.bf16.msra.mxu0 0
    %662 = vmatprep.subr.bf16.mxu0 0
    %663 = vmatpush1.bf16.msra.mxu0 0
    %664 = vmatprep.mubr.bf16.mxu0 0
    %665 = vmatmul.mubr.bf16.gmra.mrb[0].mxu0 %v190
    %v666 = vpop.f32.mrb[0].mxu0
    %v667 = vadd.f32 %v625, %v666
    %v668 = vpop.f32.mrb[0].mxu0
    %v669 = vpop.f32.mrb[0].mxu0
    %v670 = vpop.f32.mrb[0].mxu0
    %671 = vdwg.mxu0
    %v672 = vld [vmem:[%s7] sm:$0xf]
    %v673 = vld [vmem:[%s7 + $0x4] sm:$0xf]
    %v674 = vld [vmem:[%s7 + $0x8] sm:$0xf]
    %v675 = vld [vmem:[%s7 + $0xc] sm:$0xf]
    %v678 = vunpack.c.l.b16 %v674
    %v679 = vunpack.c.l.b16 %v675
    %v680 = vpack.c.b16 %v679, %v678
    %v683 = vsel %vm188, %v621, 0
    %685 = vmatprep.subr.bf16.mxu0 0
    %686 = vmatpush1.bf16.msra.mxu0 %v680
    %687 = vmatprep.subr.bf16.mxu0 0
    %688 = vmatpush1.bf16.msra.mxu0 0
    %689 = vmatprep.subr.bf16.mxu0 0
    %690 = vmatpush1.bf16.msra.mxu0 0
    %691 = vmatprep.subr.bf16.mxu0 0
    %692 = vmatpush1.bf16.msra.mxu0 0
    %693 = vmatprep.subr.bf16.mxu0 0
    %694 = vmatpush1.bf16.msra.mxu0 0
    %695 = vmatprep.subr.bf16.mxu0 0
    %696 = vmatpush1.bf16.msra.mxu0 0
    %697 = vmatprep.subr.bf16.mxu0 0
    %698 = vmatpush1.bf16.msra.mxu0 0
    %699 = vmatprep.subr.bf16.mxu0 0
    %700 = vmatpush1.bf16.msra.mxu0 0
    %701 = vmatprep.subr.bf16.mxu0 0
    %702 = vmatpush1.bf16.msra.mxu0 0
    %703 = vmatprep.subr.bf16.mxu0 0
    %704 = vmatpush1.bf16.msra.mxu0 0
    %705 = vmatprep.subr.bf16.mxu0 0
    %706 = vmatpush1.bf16.msra.mxu0 0
    %707 = vmatprep.subr.bf16.mxu0 0
    %708 = vmatpush1.bf16.msra.mxu0 0
    %709 = vmatprep.subr.bf16.mxu0 0
    %710 = vmatpush1.bf16.msra.mxu0 0
    %711 = vmatprep.subr.bf16.mxu0 0
    %712 = vmatpush1.bf16.msra.mxu0 0
    %713 = vmatprep.subr.bf16.mxu0 0
    %714 = vmatpush1.bf16.msra.mxu0 0
    %715 = vmatprep.subr.bf16.mxu0 0
    %716 = vmatpush1.bf16.msra.mxu0 0
    %717 = vmatprep.mubr.bf16.mxu0 0
    %718 = vmatmul.mubr.bf16.gmra.mrb[0].mxu0 %v683
    %v719 = vpop.f32.mrb[0].mxu0
    %v720 = vadd.f32 0.0, %v719
    %v721 = vpop.f32.mrb[0].mxu0
    %v722 = vpop.f32.mrb[0].mxu0
    %v723 = vpop.f32.mrb[0].mxu0
    %724 = vdwg.mxu0
    %v727 = vunpack.c.l.b16 %v672
    %v728 = vunpack.c.l.b16 %v673
    %v729 = vpack.c.b16 %v728, %v727
    %v731 = vsel %vm188, %v48, 0
    %733 = vmatprep.subr.bf16.mxu0 0
    %734 = vmatpush1.bf16.msra.mxu0 %v729
    %735 = vmatprep.subr.bf16.mxu0 0
    %736 = vmatpush1.bf16.msra.mxu0 0
    %737 = vmatprep.subr.bf16.mxu0 0
    %738 = vmatpush1.bf16.msra.mxu0 0
    %739 = vmatprep.subr.bf16.mxu0 0
    %740 = vmatpush1.bf16.msra.mxu0 0
    %741 = vmatprep.subr.bf16.mxu0 0
    %742 = vmatpush1.bf16.msra.mxu0 0
    %743 = vmatprep.subr.bf16.mxu0 0
    %744 = vmatpush1.bf16.msra.mxu0 0
    %745 = vmatprep.subr.bf16.mxu0 0
    %746 = vmatpush1.bf16.msra.mxu0 0
    %747 = vmatprep.subr.bf16.mxu0 0
    %748 = vmatpush1.bf16.msra.mxu0 0
    %749 = vmatprep.subr.bf16.mxu0 0
    %750 = vmatpush1.bf16.msra.mxu0 0
    %751 = vmatprep.subr.bf16.mxu0 0
    %752 = vmatpush1.bf16.msra.mxu0 0
    %753 = vmatprep.subr.bf16.mxu0 0
    %754 = vmatpush1.bf16.msra.mxu0 0
    %755 = vmatprep.subr.bf16.mxu0 0
    %756 = vmatpush1.bf16.msra.mxu0 0
    %757 = vmatprep.subr.bf16.mxu0 0
    %758 = vmatpush1.bf16.msra.mxu0 0
    %759 = vmatprep.subr.bf16.mxu0 0
    %760 = vmatpush1.bf16.msra.mxu0 0
    %761 = vmatprep.subr.bf16.mxu0 0
    %762 = vmatpush1.bf16.msra.mxu0 0
    %763 = vmatprep.subr.bf16.mxu0 0
    %764 = vmatpush1.bf16.msra.mxu0 0
    %765 = vmatprep.mubr.bf16.mxu0 0
    %766 = vmatmul.mubr.bf16.gmra.mrb[0].mxu0 %v731
    %v767 = vpop.f32.mrb[0].mxu0
    %v768 = vadd.f32 %v720, %v767
    %v769 = vpop.f32.mrb[0].mxu0
    %v770 = vpop.f32.mrb[0].mxu0
    %v771 = vpop.f32.mrb[0].mxu0
    %772 = vdwg.mxu0
    %v773 = vlaneseq
    %v774 = vshrl.u32 %v773, 7
    %v775 = vsub.s32 0, %v774
    %v776 = vrot.slane %v667, %v775
    %v777 = vadd.f32 %v768, %v776
    %v778 = vmax.f32 %v777, 0.0
    %v779 = vpack.c.bf16 %v778, %v778
    %v780 = vld [vmem:[%s8] sm:$0xf]
    %v781 = vld [vmem:[%s8 + $0x4] sm:$0xf]
    %v782 = vld [vmem:[%s8 + $0x8] sm:$0xf]
    %v783 = vld [vmem:[%s8 + $0xc] sm:$0xf]
    %v784 = vld [vmem:[%s8 + $0x10] sm:$0xf]
    %v785 = vld [vmem:[%s8 + $0x14] sm:$0xf]
    %v786 = vld [vmem:[%s8 + $0x18] sm:$0xf]
    %v787 = vld [vmem:[%s8 + $0x1c] sm:$0xf]
    %v788 = vld [vmem:[%s8 + $0x20] sm:$0xf]
    %v789 = vld [vmem:[%s8 + $0x24] sm:$0xf]
    %v790 = vld [vmem:[%s8 + $0x28] sm:$0xf]
    %v791 = vld [vmem:[%s8 + $0x2c] sm:$0xf]
    %v792 = vld [vmem:[%s8 + $0x30] sm:$0xf]
    %v793 = vld [vmem:[%s8 + $0x34] sm:$0xf]
    %v794 = vld [vmem:[%s8 + $0x38] sm:$0xf]
    %v795 = vld [vmem:[%s8 + $0x3c] sm:$0xf]
    %v796 = vld [vmem:[%s8 + $0x40] sm:$0x1]
    %v797 = vunpack.c.l.bf16 %v796
    %v798 = vlaneseq
    %v799 = vshrl.u32 %v798, 7
    %v800 = vsub.s32 0, %v799
    %v801 = vrot.slane %v797, %v800
    %v818 = vunpack.c.l.b16 %v780
    %v819 = vunpack.c.l.b16 %v781
    %v820 = vunpack.c.l.b16 %v782
    %v821 = vunpack.c.l.b16 %v783
    %v822 = vunpack.c.l.b16 %v784
    %v823 = vunpack.c.l.b16 %v785
    %v824 = vunpack.c.l.b16 %v786
    %v825 = vunpack.c.l.b16 %v787
    %v826 = vunpack.c.l.b16 %v788
    %v827 = vunpack.c.l.b16 %v789
    %v828 = vunpack.c.l.b16 %v790
    %v829 = vunpack.c.l.b16 %v791
    %v830 = vunpack.c.l.b16 %v792
    %v831 = vunpack.c.l.b16 %v793
    %v832 = vunpack.c.l.b16 %v794
    %v833 = vunpack.c.l.b16 %v795
    %v834 = vpack.c.b16 %v819, %v818
    %v835 = vpack.c.b16 %v821, %v820
    %v836 = vpack.c.b16 %v823, %v822
    %v837 = vpack.c.b16 %v825, %v824
    %v838 = vpack.c.b16 %v827, %v826
    %v839 = vpack.c.b16 %v829, %v828
    %v840 = vpack.c.b16 %v831, %v830
    %v841 = vpack.c.b16 %v833, %v832
    %850 = vmatprep.subr.bf16.mxu0 0
    %851 = vmatpush1.bf16.msra.mxu0 %v834
    %852 = vmatprep.subr.bf16.mxu0 0
    %853 = vmatpush1.bf16.msra.mxu0 %v835
    %854 = vmatprep.subr.bf16.mxu0 0
    %855 = vmatpush1.bf16.msra.mxu0 %v836
    %856 = vmatprep.subr.bf16.mxu0 0
    %857 = vmatpush1.bf16.msra.mxu0 %v837
    %858 = vmatprep.subr.bf16.mxu0 0
    %859 = vmatpush1.bf16.msra.mxu0 %v838
    %860 = vmatprep.subr.bf16.mxu0 0
    %861 = vmatpush1.bf16.msra.mxu0 %v839
    %862 = vmatprep.subr.bf16.mxu0 0
    %863 = vmatpush1.bf16.msra.mxu0 %v840
    %864 = vmatprep.subr.bf16.mxu0 0
    %865 = vmatpush1.bf16.msra.mxu0 %v841
    %866 = vmatprep.subr.bf16.mxu0 0
    %867 = vmatpush1.bf16.msra.mxu0 0
    %868 = vmatprep.subr.bf16.mxu0 0
    %869 = vmatpush1.bf16.msra.mxu0 0
    %870 = vmatprep.subr.bf16.mxu0 0
    %871 = vmatpush1.bf16.msra.mxu0 0
    %872 = vmatprep.subr.bf16.mxu0 0
    %873 = vmatpush1.bf16.msra.mxu0 0
    %874 = vmatprep.subr.bf16.mxu0 0
    %875 = vmatpush1.bf16.msra.mxu0 0
    %876 = vmatprep.subr.bf16.mxu0 0
    %877 = vmatpush1.bf16.msra.mxu0 0
    %878 = vmatprep.subr.bf16.mxu0 0
    %879 = vmatpush1.bf16.msra.mxu0 0
    %880 = vmatprep.subr.bf16.mxu0 0
    %881 = vmatpush1.bf16.msra.mxu0 0
    %882 = vmatprep.mubr.bf16.mxu0 0
    %883 = vmatmul.mubr.bf16.gmra.mrb[0].mxu0 %v779
    %v884 = vpop.f32.mrb[0].mxu0
    %v885 = vadd.f32 %v801, %v884
    %v886 = vpop.f32.mrb[0].mxu0
    %v887 = vpop.f32.mrb[0].mxu0
    %v888 = vpop.f32.mrb[0].mxu0
    %889 = vdwg.mxu0
    %v890 = vmax.f32 %v885, 0.0
    %v891 = vld [vmem:[%s8 + $0x48] sm:$0x1]
    %v892 = vunpack.c.l.bf16 %v891
    %v893 = vld [vmem:[%s8 + $0x50] sm:$0x1]
    %v894 = vunpack.c.l.bf16 %v893
    %vm895 = vcmp.lt.s32.totalorder %v52, 6
    %v896 = vsel %vm895, 1, 0
    %v897 = vcvt.s32.f32 %v896
    %v898 = vsel %vm188, %v890, 0.0
    %899 = vadd.xlane.f32.xlu0 %v898
    %v900 = vpop.xlane.xlu0 %899
    %v901 = vmul.f32 %v900, 0.16666667
    %v902 = vsub.f32 %v890, %v901
    %v903 = vmul.f32 %v902, %v897
    %v904 = vmul.f32 %v903, %v903
    %v905 = vsel %vm188, %v904, 0.0
    %906 = vadd.xlane.f32.xlu0 %v905
    %v907 = vpop.xlane.xlu0 %906
    %v908 = vmul.f32 %v907, 0.16666667
    %v909 = vadd.f32 %v908, 1e-05
    %v910 = vrsqrt.pop %v909
    %v911 = vmul.f32 %v903, %v910
    %v912 = vlaneseq
    %v913 = vshrl.u32 %v912, 7
    %v914 = vsub.s32 0, %v913
    %v915 = vrot.slane %v892, %v914
    %v916 = vmul.f32 %v911, %v915
    %v917 = vlaneseq
    %v918 = vshrl.u32 %v917, 7
    %v919 = vsub.s32 0, %v918
    %v920 = vrot.slane %v894, %v919
    %v921 = vadd.f32 %v916, %v920
    %922 = vst.msk [vmem:[#allocation4] sm:$0xff] %vm188, %v921
    %v923 = vsel %vm188, %v921, 0.0
    %v924 = vrot.slane %v923, 4
    %v925 = vadd.f32 %v923, %v924
    %v926 = vrot.slane %v925, 2
    %v927 = vadd.f32 %v925, %v926
    %v928 = vrot.slane %v927, 1
    %v929 = vadd.f32 %v927, %v928
    %v930 = vpack.c.bf16 %v929, %v929
    %v931 = vsel %vm188, %v557, 0.0
    %v932 = vsel %vm188, %v558, 0.0
    %v933 = vadd.f32 %v931, %v932
    %v934 = vrot.slane %v933, 4
    %v935 = vadd.f32 %v933, %v934
    %v936 = vrot.slane %v935, 2
    %v937 = vadd.f32 %v935, %v936
    %v938 = vrot.slane %v937, 1
    %v939 = vadd.f32 %v937, %v938
    %v940 = vpack.c.bf16 %v939, %v939
    %v941 = vld [vmem:[%s9] sm:$0xf]
    %v942 = vld [vmem:[%s9 + $0x4] sm:$0xf]
    %v943 = vld [vmem:[%s9 + $0x8] sm:$0xf]
    %v944 = vld [vmem:[%s9 + $0xc] sm:$0xf]
    %v947 = vunpack.c.l.b16 %v943
    %v948 = vunpack.c.l.b16 %v944
    %v949 = vpack.c.b16 %v948, %v947
    %v952 = vsel %vm188, %v930, 0
    %954 = vmatprep.subr.bf16.mxu0 0
    %955 = vmatpush1.bf16.msra.mxu0 %v949
    %956 = vmatprep.subr.bf16.mxu0 0
    %957 = vmatpush1.bf16.msra.mxu0 0
    %958 = vmatprep.subr.bf16.mxu0 0
    %959 = vmatpush1.bf16.msra.mxu0 0
    %960 = vmatprep.subr.bf16.mxu0 0
    %961 = vmatpush1.bf16.msra.mxu0 0
    %962 = vmatprep.subr.bf16.mxu0 0
    %963 = vmatpush1.bf16.msra.mxu0 0
    %964 = vmatprep.subr.bf16.mxu0 0
    %965 = vmatpush1.bf16.msra.mxu0 0
    %966 = vmatprep.subr.bf16.mxu0 0
    %967 = vmatpush1.bf16.msra.mxu0 0
    %968 = vmatprep.subr.bf16.mxu0 0
    %969 = vmatpush1.bf16.msra.mxu0 0
    %970 = vmatprep.subr.bf16.mxu0 0
    %971 = vmatpush1.bf16.msra.mxu0 0
    %972 = vmatprep.subr.bf16.mxu0 0
    %973 = vmatpush1.bf16.msra.mxu0 0
    %974 = vmatprep.subr.bf16.mxu0 0
    %975 = vmatpush1.bf16.msra.mxu0 0
    %976 = vmatprep.subr.bf16.mxu0 0
    %977 = vmatpush1.bf16.msra.mxu0 0
    %978 = vmatprep.subr.bf16.mxu0 0
    %979 = vmatpush1.bf16.msra.mxu0 0
    %980 = vmatprep.subr.bf16.mxu0 0
    %981 = vmatpush1.bf16.msra.mxu0 0
    %982 = vmatprep.subr.bf16.mxu0 0
    %983 = vmatpush1.bf16.msra.mxu0 0
    %984 = vmatprep.subr.bf16.mxu0 0
    %985 = vmatpush1.bf16.msra.mxu0 0
    %986 = vmatprep.mubr.bf16.mxu0 0
    %987 = vmatmul.mubr.bf16.gmra.mrb[0].mxu0 %v952
    %v988 = vpop.f32.mrb[0].mxu0
    %v989 = vadd.f32 0.0, %v988
    %v990 = vpop.f32.mrb[0].mxu0
    %v991 = vpop.f32.mrb[0].mxu0
    %v992 = vpop.f32.mrb[0].mxu0
    %993 = vdwg.mxu0
    %v996 = vunpack.c.l.b16 %v941
    %v997 = vunpack.c.l.b16 %v942
    %v998 = vpack.c.b16 %v997, %v996
    %1000 = vmatprep.subr.bf16.mxu0 0
    %1001 = vmatpush1.bf16.msra.mxu0 %v998
    %1002 = vmatprep.subr.bf16.mxu0 0
    %1003 = vmatpush1.bf16.msra.mxu0 0
    %1004 = vmatprep.subr.bf16.mxu0 0
    %1005 = vmatpush1.bf16.msra.mxu0 0
    %1006 = vmatprep.subr.bf16.mxu0 0
    %1007 = vmatpush1.bf16.msra.mxu0 0
    %1008 = vmatprep.subr.bf16.mxu0 0
    %1009 = vmatpush1.bf16.msra.mxu0 0
    %1010 = vmatprep.subr.bf16.mxu0 0
    %1011 = vmatpush1.bf16.msra.mxu0 0
    %1012 = vmatprep.subr.bf16.mxu0 0
    %1013 = vmatpush1.bf16.msra.mxu0 0
    %1014 = vmatprep.subr.bf16.mxu0 0
    %1015 = vmatpush1.bf16.msra.mxu0 0
    %1016 = vmatprep.subr.bf16.mxu0 0
    %1017 = vmatpush1.bf16.msra.mxu0 0
    %1018 = vmatprep.subr.bf16.mxu0 0
    %1019 = vmatpush1.bf16.msra.mxu0 0
    %1020 = vmatprep.subr.bf16.mxu0 0
    %1021 = vmatpush1.bf16.msra.mxu0 0
    %1022 = vmatprep.subr.bf16.mxu0 0
    %1023 = vmatpush1.bf16.msra.mxu0 0
    %1024 = vmatprep.subr.bf16.mxu0 0
    %1025 = vmatpush1.bf16.msra.mxu0 0
    %1026 = vmatprep.subr.bf16.mxu0 0
    %1027 = vmatpush1.bf16.msra.mxu0 0
    %1028 = vmatprep.subr.bf16.mxu0 0
    %1029 = vmatpush1.bf16.msra.mxu0 0
    %1030 = vmatprep.subr.bf16.mxu0 0
    %1031 = vmatpush1.bf16.msra.mxu0 0
    %1032 = vmatprep.mubr.bf16.mxu0 0
    %1033 = vmatmul.mubr.bf16.gmra.mrb[0].mxu0 %v190
    %v1034 = vpop.f32.mrb[0].mxu0
    %v1035 = vadd.f32 %v989, %v1034
    %v1036 = vpop.f32.mrb[0].mxu0
    %v1037 = vpop.f32.mrb[0].mxu0
    %v1038 = vpop.f32.mrb[0].mxu0
    %1039 = vdwg.mxu0
    %v1040 = vld [vmem:[%s9 + $0x10] sm:$0xf]
    %v1041 = vld [vmem:[%s9 + $0x14] sm:$0xf]
    %v1044 = vunpack.c.l.b16 %v1040
    %v1045 = vunpack.c.l.b16 %v1041
    %v1046 = vpack.c.b16 %v1045, %v1044
    %v1049 = vsel %vm188, %v940, 0
    %1051 = vmatprep.subr.bf16.mxu0 0
    %1052 = vmatpush1.bf16.msra.mxu0 %v1046
    %1053 = vmatprep.subr.bf16.mxu0 0
    %1054 = vmatpush1.bf16.msra.mxu0 0
    %1055 = vmatprep.subr.bf16.mxu0 0
    %1056 = vmatpush1.bf16.msra.mxu0 0
    %1057 = vmatprep.subr.bf16.mxu0 0
    %1058 = vmatpush1.bf16.msra.mxu0 0
    %1059 = vmatprep.subr.bf16.mxu0 0
    %1060 = vmatpush1.bf16.msra.mxu0 0
    %1061 = vmatprep.subr.bf16.mxu0 0
    %1062 = vmatpush1.bf16.msra.mxu0 0
    %1063 = vmatprep.subr.bf16.mxu0 0
    %1064 = vmatpush1.bf16.msra.mxu0 0
    %1065 = vmatprep.subr.bf16.mxu0 0
    %1066 = vmatpush1.bf16.msra.mxu0 0
    %1067 = vmatprep.subr.bf16.mxu0 0
    %1068 = vmatpush1.bf16.msra.mxu0 0
    %1069 = vmatprep.subr.bf16.mxu0 0
    %1070 = vmatpush1.bf16.msra.mxu0 0
    %1071 = vmatprep.subr.bf16.mxu0 0
    %1072 = vmatpush1.bf16.msra.mxu0 0
    %1073 = vmatprep.subr.bf16.mxu0 0
    %1074 = vmatpush1.bf16.msra.mxu0 0
    %1075 = vmatprep.subr.bf16.mxu0 0
    %1076 = vmatpush1.bf16.msra.mxu0 0
    %1077 = vmatprep.subr.bf16.mxu0 0
    %1078 = vmatpush1.bf16.msra.mxu0 0
    %1079 = vmatprep.subr.bf16.mxu0 0
    %1080 = vmatpush1.bf16.msra.mxu0 0
    %1081 = vmatprep.subr.bf16.mxu0 0
    %1082 = vmatpush1.bf16.msra.mxu0 0
    %1083 = vmatprep.mubr.bf16.mxu0 0
    %1084 = vmatmul.mubr.bf16.gmra.mrb[0].mxu0 %v1049
    %v1085 = vpop.f32.mrb[0].mxu0
    %v1086 = vadd.f32 0.0, %v1085
    %v1087 = vpop.f32.mrb[0].mxu0
    %v1088 = vpop.f32.mrb[0].mxu0
    %v1089 = vpop.f32.mrb[0].mxu0
    %1090 = vdwg.mxu0
    %v1091 = vadd.f32 %v1035, %v1086
    %v1092 = vld [vmem:[%s9 + $0x18] sm:$0x1]
    %v1093 = vunpack.c.l.bf16 %v1092
    %v1094 = vadd.f32 %v1091, %v1093
    %v1095 = vmax.f32 %v1094, 0.0
    %v1096 = vpack.c.bf16 %v1095, %v1095
    %v1097 = vld [vmem:[%s10] sm:$0xf]
    %v1098 = vld [vmem:[%s10 + $0x4] sm:$0xf]
    %v1099 = vld [vmem:[%s10 + $0x8] sm:$0xf]
    %v1100 = vld [vmem:[%s10 + $0xc] sm:$0xf]
    %v1101 = vld [vmem:[%s10 + $0x10] sm:$0xf]
    %v1102 = vld [vmem:[%s10 + $0x14] sm:$0xf]
    %v1103 = vld [vmem:[%s10 + $0x18] sm:$0xf]
    %v1104 = vld [vmem:[%s10 + $0x1c] sm:$0xf]
    %v1105 = vld [vmem:[%s10 + $0x20] sm:$0xf]
    %v1106 = vld [vmem:[%s10 + $0x24] sm:$0xf]
    %v1107 = vld [vmem:[%s10 + $0x28] sm:$0xf]
    %v1108 = vld [vmem:[%s10 + $0x2c] sm:$0xf]
    %v1109 = vld [vmem:[%s10 + $0x30] sm:$0xf]
    %v1110 = vld [vmem:[%s10 + $0x34] sm:$0xf]
    %v1111 = vld [vmem:[%s10 + $0x38] sm:$0xf]
    %v1112 = vld [vmem:[%s10 + $0x3c] sm:$0xf]
    %v1113 = vld [vmem:[%s10 + $0x40] sm:$0x1]
    %v1114 = vunpack.c.l.bf16 %v1113
    %v1131 = vunpack.c.l.b16 %v1097
    %v1132 = vunpack.c.l.b16 %v1098
    %v1133 = vunpack.c.l.b16 %v1099
    %v1134 = vunpack.c.l.b16 %v1100
    %v1135 = vunpack.c.l.b16 %v1101
    %v1136 = vunpack.c.l.b16 %v1102
    %v1137 = vunpack.c.l.b16 %v1103
    %v1138 = vunpack.c.l.b16 %v1104
    %v1139 = vunpack.c.l.b16 %v1105
    %v1140 = vunpack.c.l.b16 %v1106
    %v1141 = vunpack.c.l.b16 %v1107
    %v1142 = vunpack.c.l.b16 %v1108
    %v1143 = vunpack.c.l.b16 %v1109
    %v1144 = vunpack.c.l.b16 %v1110
    %v1145 = vunpack.c.l.b16 %v1111
    %v1146 = vunpack.c.l.b16 %v1112
    %v1147 = vpack.c.b16 %v1132, %v1131
    %v1148 = vpack.c.b16 %v1134, %v1133
    %v1149 = vpack.c.b16 %v1136, %v1135
    %v1150 = vpack.c.b16 %v1138, %v1137
    %v1151 = vpack.c.b16 %v1140, %v1139
    %v1152 = vpack.c.b16 %v1142, %v1141
    %v1153 = vpack.c.b16 %v1144, %v1143
    %v1154 = vpack.c.b16 %v1146, %v1145
    %1163 = vmatprep.subr.bf16.mxu0 0
    %1164 = vmatpush1.bf16.msra.mxu0 %v1147
    %1165 = vmatprep.subr.bf16.mxu0 0
    %1166 = vmatpush1.bf16.msra.mxu0 %v1148
    %1167 = vmatprep.subr.bf16.mxu0 0
    %1168 = vmatpush1.bf16.msra.mxu0 %v1149
    %1169 = vmatprep.subr.bf16.mxu0 0
    %1170 = vmatpush1.bf16.msra.mxu0 %v1150
    %1171 = vmatprep.subr.bf16.mxu0 0
    %1172 = vmatpush1.bf16.msra.mxu0 %v1151
    %1173 = vmatprep.subr.bf16.mxu0 0
    %1174 = vmatpush1.bf16.msra.mxu0 %v1152
    %1175 = vmatprep.subr.bf16.mxu0 0
    %1176 = vmatpush1.bf16.msra.mxu0 %v1153
    %1177 = vmatprep.subr.bf16.mxu0 0
    %1178 = vmatpush1.bf16.msra.mxu0 %v1154
    %1179 = vmatprep.subr.bf16.mxu0 0
    %1180 = vmatpush1.bf16.msra.mxu0 0
    %1181 = vmatprep.subr.bf16.mxu0 0
    %1182 = vmatpush1.bf16.msra.mxu0 0
    %1183 = vmatprep.subr.bf16.mxu0 0
    %1184 = vmatpush1.bf16.msra.mxu0 0
    %1185 = vmatprep.subr.bf16.mxu0 0
    %1186 = vmatpush1.bf16.msra.mxu0 0
    %1187 = vmatprep.subr.bf16.mxu0 0
    %1188 = vmatpush1.bf16.msra.mxu0 0
    %1189 = vmatprep.subr.bf16.mxu0 0
    %1190 = vmatpush1.bf16.msra.mxu0 0
    %1191 = vmatprep.subr.bf16.mxu0 0
    %1192 = vmatpush1.bf16.msra.mxu0 0
    %1193 = vmatprep.subr.bf16.mxu0 0
    %1194 = vmatpush1.bf16.msra.mxu0 0
    %1195 = vmatprep.mubr.bf16.mxu0 0
    %1196 = vmatmul.mubr.bf16.gmra.mrb[0].mxu0 %v1096
    %v1197 = vpop.f32.mrb[0].mxu0
    %v1198 = vadd.f32 %v1114, %v1197
    %v1199 = vpop.f32.mrb[0].mxu0
    %v1200 = vpop.f32.mrb[0].mxu0
    %v1201 = vpop.f32.mrb[0].mxu0
    %1202 = vdwg.mxu0
    %v1203 = vmax.f32 %v1198, 0.0
    %vm1204 = vcmask 122880
    %1205 = vst.msk [vmem:[#allocation6] sm:$0x1] %vm1204, %v1203
    // Predicated region
    $region46: #{tpu_custom_call.1} parent=1 // pred_check
      _
    $region47: #{tpu_custom_call.1} parent=1 // pred_check_branch
      %1207 = sbr.rel (0) target = $region49
    $region48: #{tpu_custom_call.1} parent=1 // pred_region
      %s1209 = ssub.s32 256, 256
      %1210 = vsyncadd [#allocation3], %s1209
      %s1211 = sshll.u32 [#allocation2], 4
      %s1212 = int_to_ptr.vmem [resolvable:$true] %s1211
      %1217 = dma.vmem_to_hbm [thread:$0]  %s1212, 256, %s11, [#allocation3], 128, 128, 8
    $region49: #{tpu_custom_call.1} parent=1 // pred_fallthru
      _
    // Predicated region
    $region50: #{tpu_custom_call.1} parent=1 // pred_check
      _
    $region51: #{tpu_custom_call.1} parent=1 // pred_check_branch
      %1219 = sbr.rel (0) target = $region53
    $region52: #{tpu_custom_call.1} parent=1 // pred_region
      %s1221 = ssub.s32 128, 128
      %1222 = vsyncadd [#allocation5], %s1221
      %s1224 = sshll.u32 [#allocation4], 4
      %s1225 = int_to_ptr.vmem [resolvable:$true] %s1224
      %1227 = dma.vmem_to_hbm [thread:$0]  %s1225, 128, %s12, [#allocation5]
    $region53: #{tpu_custom_call.1} parent=1 // pred_fallthru
      _
    // Predicated region
    $region54: #{tpu_custom_call.1} parent=1 // pred_check
      _
    $region55: #{tpu_custom_call.1} parent=1 // pred_check_branch
      %1229 = sbr.rel (0) target = $region57
    $region56: #{tpu_custom_call.1} parent=1 // pred_region
      %s1231 = ssub.s32 16, 16
      %1232 = vsyncadd [#allocation5], %s1231
      %s1234 = sshll.u32 [#allocation6], 4
      %s1235 = int_to_ptr.vmem [resolvable:$true] %s1234
      %1237 = dma.vmem_to_hbm [thread:$0]  %s1235, 16, %s13, [#allocation5]
    $region57: #{tpu_custom_call.1} parent=1 // pred_fallthru
      _
    // Predicated region
    $region58: #{tpu_custom_call.1} parent=1 // pred_check
      _
    $region59: #{tpu_custom_call.1} parent=1 // pred_check_branch
      %1239 = sbr.rel (0) target = $region61
    $region60: #{tpu_custom_call.1} parent=1 // pred_region
      %1240 = dma.done [#allocation3], 256
    $region61: #{tpu_custom_call.1} parent=1 // pred_fallthru
      _
    // Predicated region
    $region62: #{tpu_custom_call.1} parent=1 // pred_check
      _
    $region63: #{tpu_custom_call.1} parent=1 // pred_check_branch
      %1242 = sbr.rel (0) target = $region65
    $region64: #{tpu_custom_call.1} parent=1 // pred_region
      %1243 = dma.done [#allocation5], 128
    $region65: #{tpu_custom_call.1} parent=1 // pred_fallthru
      _
    // Predicated region
    $region66: #{tpu_custom_call.1} parent=1 // pred_check
      _
    $region67: #{tpu_custom_call.1} parent=1 // pred_check_branch
      %1245 = sbr.rel (0) target = $region69
    $region68: #{tpu_custom_call.1} parent=1 // pred_region
      %1246 = dma.done [#allocation5], 16
    $region69: #{tpu_custom_call.1} parent=1 // pred_fallthru
      _
    %1247 = vsyncpa [#allocation3], 1
    %1248 = vsyncpa [#allocation5], 1

</llo_original>
